<compile_context>
chip_gen: v5e
topology: v5e:2x2
jax: 0.10.0
libtpu: 0.0.40
codegen_flags: <defaults>
</compile_context>

<pallas_src>
import functools
import math

import jax
import jax.numpy as jnp
from jax.experimental import pallas as pl
from jax.experimental.pallas import tpu as pltpu


# ----------------------------------------------------------------------------
# small helpers
# ----------------------------------------------------------------------------
def _round_up(x, m):
    return (x + m - 1) // m * m


def _cdiv(a, b):
    return (a + b - 1) // b


def _pick_row_tile(n_rows, tile_m):
    """Row tile: multiple of 8 sublanes; prefer an EVEN (>=2) number of grid steps
    so both v7x TensorCores get a balanced share of the parallel row axis."""
    n8 = _round_up(max(n_rows, 8), 8)
    tm = min(_round_up(tile_m, 8), n8)
    steps = _cdiv(n8, tm)
    if steps % 2 == 1 and n8 > 8:
        steps += 1
        tm = _round_up(_cdiv(n8, steps), 8)
    n_pad = _round_up(n8, tm)
    return n_pad, tm


def _gen_timing_signal(length, channels, min_timescale=1.0, max_timescale=1.0e4):
    """Standard sinusoidal timing signal, shape (length, channels)."""
    position = jnp.arange(length, dtype=jnp.float32)
    num_timescales = channels // 2
    log_inc = math.log(float(max_timescale) / float(min_timescale)) / max(num_timescales - 1, 1)
    inv_timescales = min_timescale * jnp.exp(
        jnp.arange(num_timescales, dtype=jnp.float32) * -log_inc)
    scaled_time = position[:, None] * inv_timescales[None, :]
    signal = jnp.concatenate([jnp.sin(scaled_time), jnp.cos(scaled_time)], axis=1)
    signal = jnp.pad(signal, ((0, 0), (0, channels % 2)))
    return signal


def _vmem_budget_bytes():
    """Generation-aware VMEM budget: ~0.75x physical capacity."""
    try:
        cap = int(pltpu.get_tpu_info().vmem_capacity_bytes)
    except Exception:
        cap = 64 * 1024 * 1024  # conservative fallback (v7x physical per-TC VMEM)
    return (cap * 3) // 4


# ----------------------------------------------------------------------------
# the single fused kernel: proj+timing prologue, L gated layers, LayerNorm epilogue
# ----------------------------------------------------------------------------
def _fused_decoder_kernel(inp_ref, wproj_ref, tim_ref, m_ref, mt_ref,
                          w1t_ref, w1b_ref, b1_ref, w2a_ref, w2b_ref, b2_ref,
                          gam_ref, bet_ref, o_ref, acc_ref, *, e_actual, eps):
    f32 = jnp.float32
    l = pl.program_id(2)

    # ---- l == 0 prologue: embedding_proj (no bias) + timing signal, f32 carry --
    @pl.when(l == 0)
    def _():
        w_dt = wproj_ref.dtype
        xin = inp_ref[0]
        xin = xin if xin.dtype == w_dt else xin.astype(w_dt)
        acc_ref[...] = (jnp.dot(xin, wproj_ref[...], preferred_element_type=f32)
                        + tim_ref[...].astype(f32))

    # ---- gated residual combine of (m, m_tild) for layer l ---------------------
    # TODO(synk): the attention sublayers of ComplexEmoAttentionLayer are not
    # defined in the provided spec; only the fc1 -> sigmoid gate -> fc2 combine
    # plus the residual accumulation is implemented here.
    m = m_ref[0]
    mt = mt_ref[0]
    ep = m.shape[-1]

    w_dt = w1t_ref.dtype
    m_in = m if m.dtype == w_dt else m.astype(w_dt)
    mt_in = mt if mt.dtype == w_dt else mt.astype(w_dt)

    # fc1 as two (tm, 2*Ep) dots (column-concatenated quadrants): fills the
    # 256-wide MXU on v6e/v7x; lane-aligned static slices of h are free.
    h = (jnp.dot(m_in, w1t_ref[0], preferred_element_type=f32)
         + jnp.dot(mt_in, w1b_ref[0], preferred_element_type=f32)
         + b1_ref[0].astype(f32))

    # two gate branches processed sequentially to keep vreg pressure low.
    z1 = jax.nn.sigmoid(h[:, :ep])                       # EUP slot
    g1 = (z1 * m.astype(f32)).astype(w2a_ref.dtype)
    y = jnp.dot(g1, w2a_ref[0], preferred_element_type=f32)

    z2 = jax.nn.sigmoid(h[:, ep:])
    g2 = (z2 * mt.astype(f32)).astype(w2b_ref.dtype)
    y = y + jnp.dot(g2, w2b_ref[0], preferred_element_type=f32)

    acc_ref[...] = acc_ref[...] + y + b2_ref[0].astype(f32)

    # ---- l == L-1 epilogue: fused LayerNorm, single HBM writeback --------------
    @pl.when(l == pl.num_programs(2) - 1)
    def _():
        a = acc_ref[...]
        if e_actual == ep:
            mu = jnp.mean(a, axis=-1, keepdims=True)
            d = a - mu
            var = jnp.mean(d * d, axis=-1, keepdims=True)
        else:
            # feature dim zero-padded to Ep: mask the padded lanes out of the stats.
            mask = jax.lax.broadcasted_iota(jnp.int32, a.shape, 1) < e_actual
            mu = jnp.sum(jnp.where(mask, a, 0.0), axis=-1, keepdims=True) / e_actual
            d = jnp.where(mask, a - mu, 0.0)
            var = jnp.sum(d * d, axis=-1, keepdims=True) / e_actual
        inv = jax.lax.rsqrt(var + eps)
        yln = d * inv * gam_ref[...].astype(f32) + bet_ref[...].astype(f32)
        o_ref[...] = yln[None].astype(o_ref.dtype)


# ----------------------------------------------------------------------------
# one-time parameter preparation (hoisted out of the forward)
# ----------------------------------------------------------------------------
def prepare_params(raw, *, weight_dtype=None):
    """Quadrant-split the fused fc1 weight, zero-pad everything to lane-dense
    multiples of 128, and stack per-layer weights into (L, ...) arrays.
    weight_dtype=jnp.bfloat16 halves resident weight VMEM and uses the native
    bf16 MXU path (recommended on v7x); None keeps the original dtype."""
    w_proj_t = raw["w_proj_t"]
    De, E = w_proj_t.shape
    Ep = _round_up(E, 128)
    De_p = _round_up(De, 128)

    cast = (lambda a: a.astype(weight_dtype)) if weight_dtype is not None else (lambda a: a)
    pq = lambda w: jnp.pad(w, ((0, Ep - w.shape[0]), (0, Ep - w.shape[1])))
    pb = lambda b: jnp.pad(b, (0, Ep - b.shape[0]))

    w1_top, w1_bot, b1s, w2as, w2bs, b2s = [], [], [], [], [], []
    for lp in raw["layers"]:
        w1_t, b1, w2_t, b2 = lp["w1_t"], lp["b1"], lp["w2_t"], lp["b2"]
        # column-concatenated quadrants: [w1aa | w1ab] and [w1ba | w1bb]
        w1_top.append(jnp.concatenate([pq(w1_t[:E, :E]), pq(w1_t[:E, E:])], axis=1))
        w1_bot.append(jnp.concatenate([pq(w1_t[E:, :E]), pq(w1_t[E:, E:])], axis=1))
        b1s.append(jnp.concatenate([pb(b1[:E]), pb(b1[E:])]).reshape(1, 2 * Ep))
        w2as.append(pq(w2_t[:E, :]))
        w2bs.append(pq(w2_t[E:, :]))
        b2s.append(pb(b2).reshape(1, Ep))

    return dict(
        w_proj_t=cast(jnp.pad(w_proj_t, ((0, De_p - De), (0, Ep - E)))),  # (De_p, Ep)
        w1_top=cast(jnp.stack(w1_top)),      # (L, Ep, 2*Ep)
        w1_bot=cast(jnp.stack(w1_bot)),      # (L, Ep, 2*Ep)
        b1=jnp.stack(b1s),                   # (L, 1, 2*Ep)   biases stay in model dtype
        w2a=cast(jnp.stack(w2as)),           # (L, Ep, Ep)
        w2b=cast(jnp.stack(w2bs)),           # (L, Ep, Ep)
        b2=jnp.stack(b2s),                   # (L, 1, Ep)
        ln_gamma=jnp.pad(raw["ln_gamma"], (0, Ep - E)).reshape(1, Ep),
        ln_beta=jnp.pad(raw["ln_beta"], (0, Ep - E)).reshape(1, Ep),
        dims=dict(De=De, De_p=De_p, E=E, Ep=Ep, L=len(raw["layers"])),
    )


# ----------------------------------------------------------------------------
# full decoder forward (single pallas_call)
# ----------------------------------------------------------------------------
def complex_res_decoder_forward(inputs, m, m_tild, mask, prepped, *, tile_s=512, eps=1e-6):
    """inputs: (B, S, De); m, m_tild: (B, S, E)."""
    del mask  # TODO(synk): mask is only consumed by the unimplemented attention sublayers.
    dims = prepped["dims"]
    De, De_p, E, Ep, L = dims["De"], dims["De_p"], dims["E"], dims["Ep"], dims["L"]
    B, S, De_in = inputs.shape
    assert De_in == De

    s_pad, ts = _pick_row_tile(S, tile_s)

    # input_dropout == identity in eval mode.
    inputs_p = jnp.pad(inputs, ((0, 0), (0, s_pad - S), (0, De_p - De)))
    m_p = jnp.pad(m, ((0, 0), (0, s_pad - S), (0, Ep - E)))
    mt_p = jnp.pad(m_tild, ((0, 0), (0, s_pad - S), (0, Ep - E)))
    timing = jnp.pad(_gen_timing_signal(s_pad, E), ((0, 0), (0, Ep - E))).astype(inputs.dtype)

    act_bytes = jnp.dtype(inputs.dtype).itemsize
    w_bytes = jnp.dtype(prepped["w1_top"].dtype).itemsize
    N = B * s_pad

    cost = pl.CostEstimate(
        flops=int(2 * N * De_p * Ep + 12 * N * Ep * Ep * L),
        transcendentals=int(2 * N * Ep * L),
        bytes_accessed=int((N * (De_p + 3 * Ep) + s_pad * Ep) * act_bytes
                           + (De_p * Ep + L * (6 * Ep * Ep + 3 * Ep)) * w_bytes),
    )

    # VMEM budget: double-buffered blocks + f32 accumulator + f32 temporaries.
    per_layer_w = 6 * Ep * Ep * w_bytes + 3 * 8 * Ep * 4
    block_act = (ts * De_p + 4 * ts * Ep) * act_bytes
    request = 2 * (block_act + De_p * Ep * w_bytes + per_layer_w) + 8 * ts * Ep * 4
    vmem_limit = int(min(max(request, 32 * 1024 * 1024), _vmem_budget_bytes()))
    # TODO(synk): for very large E where per-layer resident weights exceed the
    # budget, switch to a K-tiled accumulator grid over Ep.

    row3 = lambda b, s, l: (b, s, 0)     # same block across l -> DMA elided on revisit
    perl = lambda b, s, l: (l, 0, 0)     # per-layer stacked weights
    cst2 = lambda b, s, l: (0, 0)        # constant 2-D blocks

    out = pl.pallas_call(
        functools.partial(_fused_decoder_kernel, e_actual=E, eps=eps),
        out_shape=jax.ShapeDtypeStruct((B, s_pad, Ep), inputs.dtype),
        grid_spec=pltpu.PrefetchScalarGridSpec(
            num_scalar_prefetch=0,
            grid=(B, s_pad // ts, L),
            in_specs=[
                pl.BlockSpec((1, ts, De_p), row3),                 # inputs
                pl.BlockSpec((De_p, Ep), cst2),                    # embedding_proj weight
                pl.BlockSpec((ts, Ep), lambda b, s, l: (s, 0)),    # timing signal
                pl.BlockSpec((1, ts, Ep), row3),                   # m
                pl.BlockSpec((1, ts, Ep), row3),                   # m_tild
                pl.BlockSpec((1, Ep, 2 * Ep), perl),               # fc1 top [w1aa|w1ab]
                pl.BlockSpec((1, Ep, 2 * Ep), perl),               # fc1 bottom [w1ba|w1bb]
                pl.BlockSpec((1, 1, 2 * Ep), perl),                # b1
                pl.BlockSpec((1, Ep, Ep), perl),                   # fc2 top half
                pl.BlockSpec((1, Ep, Ep), perl),                   # fc2 bottom half
                pl.BlockSpec((1, 1, Ep), perl),                    # b2
                pl.BlockSpec((1, Ep), cst2),                       # ln gamma
                pl.BlockSpec((1, Ep), cst2),                       # ln beta
            ],
            out_specs=pl.BlockSpec((1, ts, Ep), row3),
            scratch_shapes=[pltpu.VMEM((ts, Ep), jnp.float32)],    # f32 y across layers
        ),
        compiler_params=pltpu.CompilerParams(
            dimension_semantics=("parallel", "parallel", "arbitrary"),
            vmem_limit_bytes=vmem_limit),
        cost_estimate=cost,
    )(inputs_p, prepped["w_proj_t"], timing, m_p, mt_p,
      prepped["w1_top"], prepped["w1_bot"], prepped["b1"],
      prepped["w2a"], prepped["w2b"], prepped["b2"],
      prepped["ln_gamma"], prepped["ln_beta"])

    return out[:, :S, :E]


# ----------------------------------------------------------------------------
# parameter init (torch.nn.Linear-style uniform +/- 1/sqrt(fan_in), transposed)
# ----------------------------------------------------------------------------
def _init_linear(key, in_f, out_f, dtype=jnp.float32, bias=True):
    kw, kb = jax.random.split(key)
    bound = 1.0 / (in_f ** 0.5)
    w_t = jax.random.uniform(kw, (in_f, out_f), dtype, minval=-bound, maxval=bound)
    if not bias:
        return w_t, None
    b = jax.random.uniform(kb, (out_f,), dtype, minval=-bound, maxval=bound)
    return w_t, b


def init_params(key, embedding_size, hidden_size, num_layers, dtype=jnp.float32):
    keys = jax.random.split(key, 1 + 2 * num_layers)
    w_proj_t, _ = _init_linear(keys[0], embedding_size, hidden_size, dtype, bias=False)
    layers = []
    for l in range(num_layers):
        w1_t, b1 = _init_linear(keys[1 + 2 * l], 2 * hidden_size, 2 * hidden_size, dtype)
        w2_t, b2 = _init_linear(keys[2 + 2 * l], 2 * hidden_size, hidden_size, dtype)
        layers.append(dict(w1_t=w1_t, b1=b1, w2_t=w2_t, b2=b2))
    return dict(w_proj_t=w_proj_t, layers=layers,
                ln_gamma=jnp.ones((hidden_size,), dtype),
                ln_beta=jnp.zeros((hidden_size,), dtype))


if __name__ == "__main__":
    B, S = 2, 16
    embedding_size, hidden_size = 64, 128   # hidden chosen lane-dense (multiple of 128)
    num_layers = 2

    key = jax.random.PRNGKey(0)
    k_in, k_m, k_mt, k_p = jax.random.split(key, 4)
    inputs = jax.random.normal(k_in, (B, S, embedding_size), jnp.float32)
    m = jax.random.normal(k_m, (B, S, hidden_size), jnp.float32)
    m_tild = jax.random.normal(k_mt, (B, S, hidden_size), jnp.float32)
    mask = jnp.zeros((B, 1, S), jnp.float32)  # placeholder (attention is TODO)

    raw_params = init_params(k_p, embedding_size, hidden_size, num_layers)
    # weight_dtype=jnp.bfloat16 is the recommended v7x configuration; kept at the
    # model dtype here so the f32 reference check below is exact.
    prepped = prepare_params(raw_params, weight_dtype=None)

    y = complex_res_decoder_forward(inputs, m, m_tild, mask, prepped)
    y = jax.block_until_ready(y)

    # ---------------- pure-JAX reference of the same computation ----------------
    timing = _gen_timing_signal(S, hidden_size).astype(inputs.dtype)
    y_ref = inputs @ raw_params["w_proj_t"] + timing[None, :, :]
    mc = jnp.concatenate([m, m_tild], axis=-1)
    for lp in raw_params["layers"]:
        z = jax.nn.sigmoid(mc @ lp["w1_t"] + lp["b1"])
        y_ref = y_ref + (z * mc) @ lp["w2_t"] + lp["b2"]
    mu = y_ref.mean(-1, keepdims=True)
    var = ((y_ref - mu) ** 2).mean(-1, keepdims=True)
    y_ref = (y_ref - mu) * jax.lax.rsqrt(var + 1e-6) * raw_params["ln_gamma"] + raw_params["ln_beta"]

    assert y.shape == (B, S, hidden_size)
    err = float(jnp.max(jnp.abs(y - y_ref)))
    assert jnp.allclose(y, y_ref, atol=5e-4, rtol=5e-4), f"max abs err = {err}"

    print("KERNEL_OK")
</pallas_src>

<mosaic_0001>
module attributes {stable_mosaic.version = 11 : i64} {
  func.func @_fused_decoder_kernel(%arg0: i32, %arg1: i32, %arg2: i32, %arg3: memref<1x8x128xf32, #tpu.memory_space<vmem>>, %arg4: memref<128x128xf32, #tpu.memory_space<vmem>>, %arg5: memref<8x128xf32, #tpu.memory_space<vmem>>, %arg6: memref<1x8x128xf32, #tpu.memory_space<vmem>>, %arg7: memref<1x8x128xf32, #tpu.memory_space<vmem>>, %arg8: memref<1x128x256xf32, #tpu.memory_space<vmem>>, %arg9: memref<1x128x256xf32, #tpu.memory_space<vmem>>, %arg10: memref<1x1x256xf32, #tpu.memory_space<vmem>>, %arg11: memref<1x128x128xf32, #tpu.memory_space<vmem>>, %arg12: memref<1x128x128xf32, #tpu.memory_space<vmem>>, %arg13: memref<1x1x128xf32, #tpu.memory_space<vmem>>, %arg14: memref<1x128xf32, #tpu.memory_space<vmem>>, %arg15: memref<1x128xf32, #tpu.memory_space<vmem>>, %arg16: memref<1x8x128xf32, #tpu.memory_space<vmem>>, %arg17: memref<8x128xf32, #tpu.memory_space<vmem>>) attributes {dimension_semantics = [#tpu.dimension_semantics<parallel>, #tpu.dimension_semantics<parallel>, #tpu.dimension_semantics<arbitrary>], iteration_bounds = array<i64: 2, 2, 2>, scalar_prefetch = 0 : i64, scratch_operands = 1 : i64, tpu.core_type = #tpu.core_type<tc>, window_params = [{transform_indices = @transform_0, window_bounds = array<i64: 1, 8, 128>}, {pipeline_mode = #tpu.pipeline_mode<synchronous>, transform_indices = @transform_1, window_bounds = array<i64: 128, 128>}, {transform_indices = @transform_2, window_bounds = array<i64: 8, 128>}, {transform_indices = @transform_3, window_bounds = array<i64: 1, 8, 128>}, {transform_indices = @transform_4, window_bounds = array<i64: 1, 8, 128>}, {transform_indices = @transform_5, window_bounds = array<i64: 1, 128, 256>}, {transform_indices = @transform_6, window_bounds = array<i64: 1, 128, 256>}, {transform_indices = @transform_7, window_bounds = array<i64: 1, 1, 256>}, {transform_indices = @transform_8, window_bounds = array<i64: 1, 128, 128>}, {transform_indices = @transform_9, window_bounds = array<i64: 1, 128, 128>}, {transform_indices = @transform_10, window_bounds = array<i64: 1, 1, 128>}, {pipeline_mode = #tpu.pipeline_mode<synchronous>, transform_indices = @transform_11, window_bounds = array<i64: 1, 128>}, {pipeline_mode = #tpu.pipeline_mode<synchronous>, transform_indices = @transform_12, window_bounds = array<i64: 1, 128>}, {transform_indices = @transform_13, window_bounds = array<i64: 1, 8, 128>}]} {
    %c0_i32 = arith.constant 0 : i32
    %0 = arith.cmpi eq, %arg2, %c0_i32 : i32
    %1 = arith.extui %0 : i1 to i32
    %c0_i32_0 = arith.constant 0 : i32
    %2 = arith.cmpi ne, %1, %c0_i32_0 : i32
    scf.if %2 {
      %c0_34 = arith.constant 0 : index
      %c0_35 = arith.constant 0 : index
      %c0_36 = arith.constant 0 : index
      %49 = vector.load %arg3[%c0_34, %c0_35, %c0_36] : memref<1x8x128xf32, #tpu.memory_space<vmem>>, vector<1x8x128xf32>
      %50 = vector.shape_cast %49 : vector<1x8x128xf32> to vector<8x128xf32>
      %c0_37 = arith.constant 0 : index
      %c0_38 = arith.constant 0 : index
      %51 = vector.load %arg4[%c0_37, %c0_38] : memref<128x128xf32, #tpu.memory_space<vmem>>, vector<128x128xf32>
      %cst_39 = arith.constant dense<0.000000e+00> : vector<8x128xf32>
      %52 = tpu.matmul %50, %51, %cst_39 {dimension_numbers = #tpu.dot_dimension_numbers<[1], [0], [0], [1], [0, 0, 1, 1], [], []>} : vector<8x128xf32>, vector<128x128xf32>, vector<8x128xf32> -> vector<8x128xf32>
      %c0_40 = arith.constant 0 : index
      %c0_41 = arith.constant 0 : index
      %53 = vector.load %arg5[%c0_40, %c0_41] : memref<8x128xf32, #tpu.memory_space<vmem>>, vector<8x128xf32>
      %54 = arith.addf %52, %53 : vector<8x128xf32>
      %c0_42 = arith.constant 0 : index
      %c0_43 = arith.constant 0 : index
      %55 = vector.load %arg17[%c0_42, %c0_43] : memref<8x128xf32, #tpu.memory_space<vmem>>, vector<8x128xf32>
      tpu.vector_store %arg17[%c0_42, %c0_43], %54 {strides = array<i32>} : memref<8x128xf32, #tpu.memory_space<vmem>>, vector<8x128xf32>,
    } else {
    }
    %c0 = arith.constant 0 : index
    %c0_1 = arith.constant 0 : index
    %c0_2 = arith.constant 0 : index
    %3 = vector.load %arg6[%c0, %c0_1, %c0_2] : memref<1x8x128xf32, #tpu.memory_space<vmem>>, vector<1x8x128xf32>
    %4 = vector.shape_cast %3 : vector<1x8x128xf32> to vector<8x128xf32>
    %c0_3 = arith.constant 0 : index
    %c0_4 = arith.constant 0 : index
    %c0_5 = arith.constant 0 : index
    %5 = vector.load %arg7[%c0_3, %c0_4, %c0_5] : memref<1x8x128xf32, #tpu.memory_space<vmem>>, vector<1x8x128xf32>
    %6 = vector.shape_cast %5 : vector<1x8x128xf32> to vector<8x128xf32>
    %c0_6 = arith.constant 0 : index
    %c0_7 = arith.constant 0 : index
    %c0_8 = arith.constant 0 : index
    %7 = vector.load %arg8[%c0_6, %c0_7, %c0_8] : memref<1x128x256xf32, #tpu.memory_space<vmem>>, vector<1x128x256xf32>
    %8 = vector.shape_cast %7 : vector<1x128x256xf32> to vector<128x256xf32>
    %cst = arith.constant dense<0.000000e+00> : vector<8x256xf32>
    %9 = tpu.matmul %4, %8, %cst {dimension_numbers = #tpu.dot_dimension_numbers<[1], [0], [0], [1], [0, 0, 1, 1], [], []>} : vector<8x128xf32>, vector<128x256xf32>, vector<8x256xf32> -> vector<8x256xf32>
    %c0_9 = arith.constant 0 : index
    %c0_10 = arith.constant 0 : index
    %c0_11 = arith.constant 0 : index
    %10 = vector.load %arg9[%c0_9, %c0_10, %c0_11] : memref<1x128x256xf32, #tpu.memory_space<vmem>>, vector<1x128x256xf32>
    %11 = vector.shape_cast %10 : vector<1x128x256xf32> to vector<128x256xf32>
    %cst_12 = arith.constant dense<0.000000e+00> : vector<8x256xf32>
    %12 = tpu.matmul %6, %11, %cst_12 {dimension_numbers = #tpu.dot_dimension_numbers<[1], [0], [0], [1], [0, 0, 1, 1], [], []>} : vector<8x128xf32>, vector<128x256xf32>, vector<8x256xf32> -> vector<8x256xf32>
    %13 = arith.addf %9, %12 : vector<8x256xf32>
    %c0_13 = arith.constant 0 : index
    %c0_14 = arith.constant 0 : index
    %c0_15 = arith.constant 0 : index
    %14 = vector.load %arg10[%c0_13, %c0_14, %c0_15] : memref<1x1x256xf32, #tpu.memory_space<vmem>>, vector<1x1x256xf32>
    %15 = vector.shape_cast %14 : vector<1x1x256xf32> to vector<1x256xf32>
    %16 = vector.broadcast %15 : vector<1x256xf32> to vector<8x256xf32>
    %17 = arith.addf %13, %16 : vector<8x256xf32>
    %18 = vector.extract_strided_slice %17 {offsets = [0, 0], sizes = [8, 128], strides = [1, 1]} : vector<8x256xf32> to vector<8x128xf32>
    %19 = arith.negf %18 : vector<8x128xf32>
    %20 = math.exp %19 : vector<8x128xf32>
    %cst_16 = arith.constant 1.000000e+00 : f32
    %21 = vector.broadcast %cst_16 : f32 to vector<8x128xf32>
    %22 = arith.addf %21, %20 : vector<8x128xf32>
    %23 = arith.divf %21, %22 : vector<8x128xf32>
    %24 = arith.mulf %23, %4 : vector<8x128xf32>
    %c0_17 = arith.constant 0 : index
    %c0_18 = arith.constant 0 : index
    %c0_19 = arith.constant 0 : index
    %25 = vector.load %arg11[%c0_17, %c0_18, %c0_19] : memref<1x128x128xf32, #tpu.memory_space<vmem>>, vector<1x128x128xf32>
    %26 = vector.shape_cast %25 : vector<1x128x128xf32> to vector<128x128xf32>
    %cst_20 = arith.constant dense<0.000000e+00> : vector<8x128xf32>
    %27 = tpu.matmul %24, %26, %cst_20 {dimension_numbers = #tpu.dot_dimension_numbers<[1], [0], [0], [1], [0, 0, 1, 1], [], []>} : vector<8x128xf32>, vector<128x128xf32>, vector<8x128xf32> -> vector<8x128xf32>
    %28 = vector.extract_strided_slice %17 {offsets = [0, 128], sizes = [8, 128], strides = [1, 1]} : vector<8x256xf32> to vector<8x128xf32>
    %29 = arith.negf %28 : vector<8x128xf32>
    %30 = math.exp %29 : vector<8x128xf32>
    %cst_21 = arith.constant 1.000000e+00 : f32
    %31 = vector.broadcast %cst_21 : f32 to vector<8x128xf32>
    %32 = arith.addf %31, %30 : vector<8x128xf32>
    %33 = arith.divf %31, %32 : vector<8x128xf32>
    %34 = arith.mulf %33, %6 : vector<8x128xf32>
    %c0_22 = arith.constant 0 : index
    %c0_23 = arith.constant 0 : index
    %c0_24 = arith.constant 0 : index
    %35 = vector.load %arg12[%c0_22, %c0_23, %c0_24] : memref<1x128x128xf32, #tpu.memory_space<vmem>>, vector<1x128x128xf32>
    %36 = vector.shape_cast %35 : vector<1x128x128xf32> to vector<128x128xf32>
    %cst_25 = arith.constant dense<0.000000e+00> : vector<8x128xf32>
    %37 = tpu.matmul %34, %36, %cst_25 {dimension_numbers = #tpu.dot_dimension_numbers<[1], [0], [0], [1], [0, 0, 1, 1], [], []>} : vector<8x128xf32>, vector<128x128xf32>, vector<8x128xf32> -> vector<8x128xf32>
    %38 = arith.addf %27, %37 : vector<8x128xf32>
    %c0_26 = arith.constant 0 : index
    %c0_27 = arith.constant 0 : index
    %39 = vector.load %arg17[%c0_26, %c0_27] : memref<8x128xf32, #tpu.memory_space<vmem>>, vector<8x128xf32>
    %40 = arith.addf %39, %38 : vector<8x128xf32>
    %c0_28 = arith.constant 0 : index
    %c0_29 = arith.constant 0 : index
    %c0_30 = arith.constant 0 : index
    %41 = vector.load %arg13[%c0_28, %c0_29, %c0_30] : memref<1x1x128xf32, #tpu.memory_space<vmem>>, vector<1x1x128xf32>
    %42 = vector.shape_cast %41 : vector<1x1x128xf32> to vector<1x128xf32>
    %43 = vector.broadcast %42 : vector<1x128xf32> to vector<8x128xf32>
    %44 = arith.addf %40, %43 : vector<8x128xf32>
    %c0_31 = arith.constant 0 : index
    %c0_32 = arith.constant 0 : index
    %45 = vector.load %arg17[%c0_31, %c0_32] : memref<8x128xf32, #tpu.memory_space<vmem>>, vector<8x128xf32>
    tpu.vector_store %arg17[%c0_31, %c0_32], %44 {strides = array<i32>} : memref<8x128xf32, #tpu.memory_space<vmem>>, vector<8x128xf32>,
    %c1_i32 = arith.constant 1 : i32
    %46 = arith.cmpi eq, %arg2, %c1_i32 : i32
    %47 = arith.extui %46 : i1 to i32
    %c0_i32_33 = arith.constant 0 : i32
    %48 = arith.cmpi ne, %47, %c0_i32_33 : i32
    scf.if %48 {
      %c0_34 = arith.constant 0 : index
      %c0_35 = arith.constant 0 : index
      %49 = vector.load %arg17[%c0_34, %c0_35] : memref<8x128xf32, #tpu.memory_space<vmem>>, vector<8x128xf32>
      %cst_36 = arith.constant dense<0.000000e+00> : vector<8xf32>
      %50 = vector.multi_reduction <add>, %49, %cst_36 [1] : vector<8x128xf32> to vector<8xf32>
      %51 = vector.shape_cast %50 : vector<8xf32> to vector<8x1xf32>
      %cst_37 = arith.constant 1.280000e+02 : f32
      %52 = vector.broadcast %cst_37 : f32 to vector<8x1xf32>
      %53 = arith.divf %51, %52 : vector<8x1xf32>
      %54 = vector.broadcast %53 : vector<8x1xf32> to vector<8x128xf32>
      %55 = arith.subf %49, %54 : vector<8x128xf32>
      %56 = arith.mulf %55, %55 : vector<8x128xf32>
      %cst_38 = arith.constant dense<0.000000e+00> : vector<8xf32>
      %57 = vector.multi_reduction <add>, %56, %cst_38 [1] : vector<8x128xf32> to vector<8xf32>
      %58 = vector.shape_cast %57 : vector<8xf32> to vector<8x1xf32>
      %cst_39 = arith.constant 1.280000e+02 : f32
      %59 = vector.broadcast %cst_39 : f32 to vector<8x1xf32>
      %60 = arith.divf %58, %59 : vector<8x1xf32>
      %cst_40 = arith.constant 9.99999997E-7 : f32
      %61 = vector.broadcast %cst_40 : f32 to vector<8x1xf32>
      %62 = arith.addf %60, %61 : vector<8x1xf32>
      %63 = math.rsqrt %62 : vector<8x1xf32>
      %64 = vector.broadcast %63 : vector<8x1xf32> to vector<8x128xf32>
      %65 = arith.mulf %55, %64 : vector<8x128xf32>
      %c0_41 = arith.constant 0 : index
      %c0_42 = arith.constant 0 : index
      %66 = vector.load %arg14[%c0_41, %c0_42] : memref<1x128xf32, #tpu.memory_space<vmem>>, vector<1x128xf32>
      %67 = vector.broadcast %66 : vector<1x128xf32> to vector<8x128xf32>
      %68 = arith.mulf %65, %67 : vector<8x128xf32>
      %c0_43 = arith.constant 0 : index
      %c0_44 = arith.constant 0 : index
      %69 = vector.load %arg15[%c0_43, %c0_44] : memref<1x128xf32, #tpu.memory_space<vmem>>, vector<1x128xf32>
      %70 = vector.broadcast %69 : vector<1x128xf32> to vector<8x128xf32>
      %71 = arith.addf %68, %70 : vector<8x128xf32>
      %72 = vector.shape_cast %71 : vector<8x128xf32> to vector<1x8x128xf32>
      %c0_45 = arith.constant 0 : index
      %c0_46 = arith.constant 0 : index
      %c0_47 = arith.constant 0 : index
      %73 = vector.load %arg16[%c0_45, %c0_46, %c0_47] : memref<1x8x128xf32, #tpu.memory_space<vmem>>, vector<1x8x128xf32>
      tpu.vector_store %arg16[%c0_45, %c0_46, %c0_47], %72 {strides = array<i32>} : memref<1x8x128xf32, #tpu.memory_space<vmem>>, vector<1x8x128xf32>,
    } else {
    }
    return
  }
  func.func @transform_0(%arg0: i32, %arg1: i32, %arg2: i32) -> (i32, i32, i32) {
    %c0_i32 = arith.constant 0 : i32
    %c0_i32_0 = arith.constant 0 : i32
    return %arg0, %arg1, %c0_i32 : i32, i32, i32
  }
  func.func @transform_1(%arg0: i32, %arg1: i32, %arg2: i32) -> (i32, i32) {
    %c0_i32 = arith.constant 0 : i32
    %c0_i32_0 = arith.constant 0 : i32
    %c0_i32_1 = arith.constant 0 : i32
    return %c0_i32, %c0_i32_0 : i32, i32
  }
  func.func @transform_2(%arg0: i32, %arg1: i32, %arg2: i32) -> (i32, i32) {
    %c0_i32 = arith.constant 0 : i32
    %c0_i32_0 = arith.constant 0 : i32
    return %arg1, %c0_i32 : i32, i32
  }
  func.func @transform_3(%arg0: i32, %arg1: i32, %arg2: i32) -> (i32, i32, i32) {
    %c0_i32 = arith.constant 0 : i32
    %c0_i32_0 = arith.constant 0 : i32
    return %arg0, %arg1, %c0_i32 : i32, i32, i32
  }
  func.func @transform_4(%arg0: i32, %arg1: i32, %arg2: i32) -> (i32, i32, i32) {
    %c0_i32 = arith.constant 0 : i32
    %c0_i32_0 = arith.constant 0 : i32
    return %arg0, %arg1, %c0_i32 : i32, i32, i32
  }
  func.func @transform_5(%arg0: i32, %arg1: i32, %arg2: i32) -> (i32, i32, i32) {
    %c0_i32 = arith.constant 0 : i32
    %c0_i32_0 = arith.constant 0 : i32
    %c0_i32_1 = arith.constant 0 : i32
    return %arg2, %c0_i32, %c0_i32_0 : i32, i32, i32
  }
  func.func @transform_6(%arg0: i32, %arg1: i32, %arg2: i32) -> (i32, i32, i32) {
    %c0_i32 = arith.constant 0 : i32
    %c0_i32_0 = arith.constant 0 : i32
    %c0_i32_1 = arith.constant 0 : i32
    return %arg2, %c0_i32, %c0_i32_0 : i32, i32, i32
  }
  func.func @transform_7(%arg0: i32, %arg1: i32, %arg2: i32) -> (i32, i32, i32) {
    %c0_i32 = arith.constant 0 : i32
    %c0_i32_0 = arith.constant 0 : i32
    %c0_i32_1 = arith.constant 0 : i32
    return %arg2, %c0_i32, %c0_i32_0 : i32, i32, i32
  }
  func.func @transform_8(%arg0: i32, %arg1: i32, %arg2: i32) -> (i32, i32, i32) {
    %c0_i32 = arith.constant 0 : i32
    %c0_i32_0 = arith.constant 0 : i32
    %c0_i32_1 = arith.constant 0 : i32
    return %arg2, %c0_i32, %c0_i32_0 : i32, i32, i32
  }
  func.func @transform_9(%arg0: i32, %arg1: i32, %arg2: i32) -> (i32, i32, i32) {
    %c0_i32 = arith.constant 0 : i32
    %c0_i32_0 = arith.constant 0 : i32
    %c0_i32_1 = arith.constant 0 : i32
    return %arg2, %c0_i32, %c0_i32_0 : i32, i32, i32
  }
  func.func @transform_10(%arg0: i32, %arg1: i32, %arg2: i32) -> (i32, i32, i32) {
    %c0_i32 = arith.constant 0 : i32
    %c0_i32_0 = arith.constant 0 : i32
    %c0_i32_1 = arith.constant 0 : i32
    return %arg2, %c0_i32, %c0_i32_0 : i32, i32, i32
  }
  func.func @transform_11(%arg0: i32, %arg1: i32, %arg2: i32) -> (i32, i32) {
    %c0_i32 = arith.constant 0 : i32
    %c0_i32_0 = arith.constant 0 : i32
    %c0_i32_1 = arith.constant 0 : i32
    return %c0_i32, %c0_i32_0 : i32, i32
  }
  func.func @transform_12(%arg0: i32, %arg1: i32, %arg2: i32) -> (i32, i32) {
    %c0_i32 = arith.constant 0 : i32
    %c0_i32_0 = arith.constant 0 : i32
    %c0_i32_1 = arith.constant 0 : i32
    return %c0_i32, %c0_i32_0 : i32, i32
  }
  func.func @transform_13(%arg0: i32, %arg1: i32, %arg2: i32) -> (i32, i32, i32) {
    %c0_i32 = arith.constant 0 : i32
    %c0_i32_0 = arith.constant 0 : i32
    return %arg0, %arg1, %c0_i32 : i32, i32, i32
  }
}

</mosaic_0001>

<llo_original>
// kernel: tpu_custom_call.1
$region0: #{tpu_custom_call.1}
  #allocation0 [shape = 'u32[]', space=smem, size = 0x4, offset = 0x4, fixed_abs, tag = 'smem constant byte address 0x4 - core index']
  #allocation1 [shape = 'u32[72,128]{1,0:T(1,128)}', space=vmem, size = 0x9000, scoped, tag = 'internal scratch']
  #allocation2 [shape = 'f32[8,128]{1,0:T(8,128)}', space=vmem, size = 0x1000, scoped, tag = 'scratch operand']
  %s0 = inlined_call_operand.hbm [shape: f32[2,16,128], index: 0, kind: input, shape index: {}]
  %s1 = inlined_call_operand.hbm [shape: f32[128,128], index: 1, kind: input, shape index: {}]
  %s2 = inlined_call_operand.hbm [shape: f32[16,128], index: 2, kind: input, shape index: {}]
  %s3 = inlined_call_operand.hbm [shape: f32[2,16,128], index: 3, kind: input, shape index: {}]
  %s4 = inlined_call_operand.hbm [shape: f32[2,16,128], index: 4, kind: input, shape index: {}]
  %s5 = inlined_call_operand.hbm [shape: f32[2,128,256], index: 5, kind: input, shape index: {}]
  %s6 = inlined_call_operand.hbm [shape: f32[2,128,256], index: 6, kind: input, shape index: {}]
  %s7 = inlined_call_operand.vmem [shape: f32[2,1,256], index: 7, kind: input, shape index: {}]
  %s8 = inlined_call_operand.hbm [shape: f32[2,128,128], index: 8, kind: input, shape index: {}]
  %s9 = inlined_call_operand.hbm [shape: f32[2,128,128], index: 9, kind: input, shape index: {}]
  %s10 = inlined_call_operand.vmem [shape: f32[2,1,128], index: 10, kind: input, shape index: {}]
  %s11 = inlined_call_operand.vmem [shape: f32[1,128], index: 11, kind: input, shape index: {}]
  %s12 = inlined_call_operand.vmem [shape: f32[1,128], index: 12, kind: input, shape index: {}]
  %s13 = inlined_call_operand.hbm [shape: f32[2,16,128], index: 13, kind: output, shape index: {}]
  %s14 = sld [smem:[#allocation0]]
  $region129: #{tpu_custom_call.1} parent=0
    _
  %s16 = ssub.s32 1, %s14
  %s17 = scalar_select 0, %s16, %s14
  $region1: #{tpu_custom_call.1} parent=0
    #allocation3 [shape = 'u8[8192]{0}', space=vmem, size = 0x2000, scoped, tag = 'input window, operand 0']
    #allocation4 [shape = 's32[2]{0}', space=sflag, size = 0x8, scoped, tag = 'scoped memory for tpu_custom_call.1']
    #allocation5 [shape = 's32[2]{0}', space=sflag, size = 0x8, scoped, tag = 'scoped memory for tpu_custom_call.1']
    #allocation6 [shape = 'u8[65536]{0}', space=vmem, size = 0x10000, scoped, tag = 'input window, operand 1, single buffered']
    #allocation7 [shape = 's32[1]{0}', space=sflag, size = 0x4, scoped, tag = 'scoped memory for tpu_custom_call.1']
    #allocation8 [shape = 'u8[8192]{0}', space=vmem, size = 0x2000, scoped, tag = 'input window, operand 2']
    #allocation9 [shape = 'u8[8192]{0}', space=vmem, size = 0x2000, scoped, tag = 'input window, operand 3']
    #allocation10 [shape = 'u8[8192]{0}', space=vmem, size = 0x2000, scoped, tag = 'input window, operand 4']
    #allocation11 [shape = 'u8[262144]{0}', space=vmem, size = 0x40000, scoped, tag = 'input window, operand 5']
    #allocation12 [shape = 'u8[262144]{0}', space=vmem, size = 0x40000, scoped, tag = 'input window, operand 6']
    #allocation13 [shape = 'u8[131072]{0}', space=vmem, size = 0x20000, scoped, tag = 'input window, operand 8']
    #allocation14 [shape = 'u8[131072]{0}', space=vmem, size = 0x20000, scoped, tag = 'input window, operand 9']
    #allocation15 [shape = 'u8[8192]{0}', space=vmem, size = 0x2000, scoped, tag = 'output window, operand 0']
    %18 = vsyncpa [#allocation4], 0
    %s19 = scalar_lea.sflag [#allocation4], 1
    %20 = vsyncpa %s19, 0
    %21 = vsyncpa [#allocation7], 0
    %22 = vsyncpa [#allocation5], 0
    %s23 = scalar_lea.sflag [#allocation5], 1
    %24 = vsyncpa %s23, 0
    loop: start=0, step=1, limit=10
    $region2: #{tpu_custom_call.1} parent=1 // loop_pre_header
      _
    $region3: #{tpu_custom_call.1} parent=1 // loop_header
      %s26 = sphi 0, %s30
      %p27 = scmp.ge.s32.totalorder %s26, 10
      %s33 = sphi 0, %s52
      %s34 = sphi 0, %s48
      %s35 = sphi 0, %s44
      %s36 = sphi 0, %s33
      %s37 = sphi 0, %s34
      %s38 = sphi 0, %s35
      %s39 = sphi 0, %s36
      %s40 = sphi 0, %s37
      %s41 = sphi 0, %s38
      %s57 = sphi 0, %s59
      %s60 = sphi 0, %s57
      %s61 = sphi 0, %s60
      %s77 = sphi 0, %s61
      %s81 = sphi 0, %s81
      %s83 = sphi 0, %s81
      %s84 = sphi 0, %s83
      %s98 = sphi 0, %s84
      %s104 = sphi 0, %s106
      %s107 = sphi 0, %s104
      %s108 = sphi 0, %s107
      %s124 = sphi 0, %s108
      %s132 = sphi 0, %s134
      %s135 = sphi 0, %s132
      %s136 = sphi 0, %s135
      %s152 = sphi 0, %s136
      %s160 = sphi 0, %s162
      %s163 = sphi 0, %s160
      %s164 = sphi 0, %s163
      %s180 = sphi 0, %s164
      %s186 = sphi 0, %s188
      %s189 = sphi 0, %s186
      %s190 = sphi 0, %s189
      %s206 = sphi 0, %s190
      %s212 = sphi 0, %s214
      %s215 = sphi 0, %s212
      %s216 = sphi 0, %s215
      %s232 = sphi 0, %s216
      %s238 = sphi 0, %s240
      %s241 = sphi 0, %s238
      %s242 = sphi 0, %s241
      %s258 = sphi 0, %s242
      %s264 = sphi 0, %s266
      %s267 = sphi 0, %s264
      %s268 = sphi 0, %s267
      %s284 = sphi 0, %s268
      %s290 = sphi 0, %s292
      %s293 = sphi 0, %s290
      %s294 = sphi 0, %s293
      %s310 = sphi 0, %s294
      %s316 = sphi 0, %s318
      %s319 = sphi 0, %s316
      %s320 = sphi 0, %s319
      %s336 = sphi 0, %s320
      %s340 = sphi 0, %s340
      %s342 = sphi 0, %s340
      %s343 = sphi 0, %s342
      %s357 = sphi 0, %s343
      %s361 = sphi 0, %s361
      %s363 = sphi 0, %s361
      %s364 = sphi 0, %s363
      %s378 = sphi 0, %s364
      %s386 = sphi 0, %s388
      %s389 = sphi 0, %s386
      %s390 = sphi 0, %s389
      %s406 = sphi 0, %s390
    $region4: #{tpu_custom_call.1} parent=1 // loop_header_branch
      %29 = sbr.rel (%p27) target = $region8
    $region5: #{tpu_custom_call.1} parent=1 // loop_body
      %s31 = ssub.s32 %s26, 1
      %s32 = ssub.s32 %s26, 2
      %s42 = sadd.s32 1, %s35
      %p43 = scmp.ge.s32.totalorder %s42, 2
      %s44 = scalar_select %p43, 0, %s42
      %s45 = sadd.s32 1, %s34
      %s46 = scalar_select %p43, %s45, %s34
      %p47 = scmp.ge.s32.totalorder %s46, 2
      %s48 = scalar_select %p47, 0, %s46
      %s49 = sadd.s32 1, %s33
      %s50 = scalar_select %p47, %s49, %s33
      %p51 = scmp.ge.s32.totalorder %s50, 2
      %s52 = scalar_select %p51, 0, %s50
      %s53 = ssub.s32 %s33, %s52
      %s54 = ssub.s32 %s34, %s48
      %s55 = sor.u32 %s53, %s54
      %p56 = scmp.eq.s32.totalorder %s55, 0
      %s58 = sadd.s32 %s57, 1
      %s59 = scalar_select %p56, %s57, %s58
      %p62 = pneg %p56
      %p63 = scmp.eq.s32.totalorder %s26, 7
      %p64 = por %p62, %p63
      %p65 = scmp.ne.s32.totalorder %s57, %s60
      %p66 = scmp.eq.s32.totalorder %s26, 0
      %p67 = por %p65, %p66
      %p68 = scmp.ne.s32.totalorder %s57, %s60
      %p69 = scmp.eq.s32.totalorder %s31, 7
      %p70 = por %p68, %p69
      %p71 = scmp.ne.s32.totalorder %s60, %s61
      %p72 = scmp.eq.s32.totalorder %s31, 0
      %p73 = por %p71, %p72
      %p74 = scmp.ne.s32.totalorder %s60, %s61
      %p75 = scmp.eq.s32.totalorder %s32, 7
      %p76 = por %p74, %p75
      %p78 = scmp.ne.s32.totalorder %s61, %s77
      %p79 = scmp.eq.s32.totalorder %s32, 0
      %p80 = por %p78, %p79
      %s82 = sadd.s32 %s81, 1
      %p85 = scmp.eq.s32.totalorder %s26, 7
      %p86 = scmp.ne.s32.totalorder %s81, %s83
      %p87 = scmp.eq.s32.totalorder %s26, 0
      %p88 = por %p86, %p87
      %p89 = scmp.ne.s32.totalorder %s81, %s83
      %p90 = scmp.eq.s32.totalorder %s31, 7
      %p91 = por %p89, %p90
      %p92 = scmp.ne.s32.totalorder %s83, %s84
      %p93 = scmp.eq.s32.totalorder %s31, 0
      %p94 = por %p92, %p93
      %p95 = scmp.ne.s32.totalorder %s83, %s84
      %p96 = scmp.eq.s32.totalorder %s32, 7
      %p97 = por %p95, %p96
      %p99 = scmp.ne.s32.totalorder %s84, %s98
      %p100 = scmp.eq.s32.totalorder %s32, 0
      %p101 = por %p99, %p100
      %s102 = ssub.s32 %s34, %s48
      %p103 = scmp.eq.s32.totalorder %s102, 0
      %s105 = sadd.s32 %s104, 1
      %s106 = scalar_select %p103, %s104, %s105
      %p109 = pneg %p103
      %p110 = scmp.eq.s32.totalorder %s26, 7
      %p111 = por %p109, %p110
      %p112 = scmp.ne.s32.totalorder %s104, %s107
      %p113 = scmp.eq.s32.totalorder %s26, 0
      %p114 = por %p112, %p113
      %p115 = scmp.ne.s32.totalorder %s104, %s107
      %p116 = scmp.eq.s32.totalorder %s31, 7
      %p117 = por %p115, %p116
      %p118 = scmp.ne.s32.totalorder %s107, %s108
      %p119 = scmp.eq.s32.totalorder %s31, 0
      %p120 = por %p118, %p119
      %p121 = scmp.ne.s32.totalorder %s107, %s108
      %p122 = scmp.eq.s32.totalorder %s32, 7
      %p123 = por %p121, %p122
      %p125 = scmp.ne.s32.totalorder %s108, %s124
      %p126 = scmp.eq.s32.totalorder %s32, 0
      %p127 = por %p125, %p126
      %s128 = ssub.s32 %s33, %s52
      %s129 = ssub.s32 %s34, %s48
      %s130 = sor.u32 %s128, %s129
      %p131 = scmp.eq.s32.totalorder %s130, 0
      %s133 = sadd.s32 %s132, 1
      %s134 = scalar_select %p131, %s132, %s133
      %p137 = pneg %p131
      %p138 = scmp.eq.s32.totalorder %s26, 7
      %p139 = por %p137, %p138
      %p140 = scmp.ne.s32.totalorder %s132, %s135
      %p141 = scmp.eq.s32.totalorder %s26, 0
      %p142 = por %p140, %p141
      %p143 = scmp.ne.s32.totalorder %s132, %s135
      %p144 = scmp.eq.s32.totalorder %s31, 7
      %p145 = por %p143, %p144
      %p146 = scmp.ne.s32.totalorder %s135, %s136
      %p147 = scmp.eq.s32.totalorder %s31, 0
      %p148 = por %p146, %p147
      %p149 = scmp.ne.s32.totalorder %s135, %s136
      %p150 = scmp.eq.s32.totalorder %s32, 7
      %p151 = por %p149, %p150
      %p153 = scmp.ne.s32.totalorder %s136, %s152
      %p154 = scmp.eq.s32.totalorder %s32, 0
      %p155 = por %p153, %p154
      %s156 = ssub.s32 %s33, %s52
      %s157 = ssub.s32 %s34, %s48
      %s158 = sor.u32 %s156, %s157
      %p159 = scmp.eq.s32.totalorder %s158, 0
      %s161 = sadd.s32 %s160, 1
      %s162 = scalar_select %p159, %s160, %s161
      %p165 = pneg %p159
      %p166 = scmp.eq.s32.totalorder %s26, 7
      %p167 = por %p165, %p166
      %p168 = scmp.ne.s32.totalorder %s160, %s163
      %p169 = scmp.eq.s32.totalorder %s26, 0
      %p170 = por %p168, %p169
      %p171 = scmp.ne.s32.totalorder %s160, %s163
      %p172 = scmp.eq.s32.totalorder %s31, 7
      %p173 = por %p171, %p172
      %p174 = scmp.ne.s32.totalorder %s163, %s164
      %p175 = scmp.eq.s32.totalorder %s31, 0
      %p176 = por %p174, %p175
      %p177 = scmp.ne.s32.totalorder %s163, %s164
      %p178 = scmp.eq.s32.totalorder %s32, 7
      %p179 = por %p177, %p178
      %p181 = scmp.ne.s32.totalorder %s164, %s180
      %p182 = scmp.eq.s32.totalorder %s32, 0
      %p183 = por %p181, %p182
      %s184 = ssub.s32 %s35, %s44
      %p185 = scmp.eq.s32.totalorder %s184, 0
      %s187 = sadd.s32 %s186, 1
      %s188 = scalar_select %p185, %s186, %s187
      %p191 = pneg %p185
      %p192 = scmp.eq.s32.totalorder %s26, 7
      %p193 = por %p191, %p192
      %p194 = scmp.ne.s32.totalorder %s186, %s189
      %p195 = scmp.eq.s32.totalorder %s26, 0
      %p196 = por %p194, %p195
      %p197 = scmp.ne.s32.totalorder %s186, %s189
      %p198 = scmp.eq.s32.totalorder %s31, 7
      %p199 = por %p197, %p198
      %p200 = scmp.ne.s32.totalorder %s189, %s190
      %p201 = scmp.eq.s32.totalorder %s31, 0
      %p202 = por %p200, %p201
      %p203 = scmp.ne.s32.totalorder %s189, %s190
      %p204 = scmp.eq.s32.totalorder %s32, 7
      %p205 = por %p203, %p204
      %p207 = scmp.ne.s32.totalorder %s190, %s206
      %p208 = scmp.eq.s32.totalorder %s32, 0
      %p209 = por %p207, %p208
      %s210 = ssub.s32 %s35, %s44
      %p211 = scmp.eq.s32.totalorder %s210, 0
      %s213 = sadd.s32 %s212, 1
      %s214 = scalar_select %p211, %s212, %s213
      %p217 = pneg %p211
      %p218 = scmp.eq.s32.totalorder %s26, 7
      %p219 = por %p217, %p218
      %p220 = scmp.ne.s32.totalorder %s212, %s215
      %p221 = scmp.eq.s32.totalorder %s26, 0
      %p222 = por %p220, %p221
      %p223 = scmp.ne.s32.totalorder %s212, %s215
      %p224 = scmp.eq.s32.totalorder %s31, 7
      %p225 = por %p223, %p224
      %p226 = scmp.ne.s32.totalorder %s215, %s216
      %p227 = scmp.eq.s32.totalorder %s31, 0
      %p228 = por %p226, %p227
      %p229 = scmp.ne.s32.totalorder %s215, %s216
      %p230 = scmp.eq.s32.totalorder %s32, 7
      %p231 = por %p229, %p230
      %p233 = scmp.ne.s32.totalorder %s216, %s232
      %p234 = scmp.eq.s32.totalorder %s32, 0
      %p235 = por %p233, %p234
      %s236 = ssub.s32 %s35, %s44
      %p237 = scmp.eq.s32.totalorder %s236, 0
      %s239 = sadd.s32 %s238, 1
      %s240 = scalar_select %p237, %s238, %s239
      %p243 = pneg %p237
      %p244 = scmp.eq.s32.totalorder %s26, 7
      %p245 = por %p243, %p244
      %p246 = scmp.ne.s32.totalorder %s238, %s241
      %p247 = scmp.eq.s32.totalorder %s26, 0
      %p248 = por %p246, %p247
      %p249 = scmp.ne.s32.totalorder %s238, %s241
      %p250 = scmp.eq.s32.totalorder %s31, 7
      %p251 = por %p249, %p250
      %p252 = scmp.ne.s32.totalorder %s241, %s242
      %p253 = scmp.eq.s32.totalorder %s31, 0
      %p254 = por %p252, %p253
      %p255 = scmp.ne.s32.totalorder %s241, %s242
      %p256 = scmp.eq.s32.totalorder %s32, 7
      %p257 = por %p255, %p256
      %p259 = scmp.ne.s32.totalorder %s242, %s258
      %p260 = scmp.eq.s32.totalorder %s32, 0
      %p261 = por %p259, %p260
      %s262 = ssub.s32 %s35, %s44
      %p263 = scmp.eq.s32.totalorder %s262, 0
      %s265 = sadd.s32 %s264, 1
      %s266 = scalar_select %p263, %s264, %s265
      %p269 = pneg %p263
      %p270 = scmp.eq.s32.totalorder %s26, 7
      %p271 = por %p269, %p270
      %p272 = scmp.ne.s32.totalorder %s264, %s267
      %p273 = scmp.eq.s32.totalorder %s26, 0
      %p274 = por %p272, %p273
      %p275 = scmp.ne.s32.totalorder %s264, %s267
      %p276 = scmp.eq.s32.totalorder %s31, 7
      %p277 = por %p275, %p276
      %p278 = scmp.ne.s32.totalorder %s267, %s268
      %p279 = scmp.eq.s32.totalorder %s31, 0
      %p280 = por %p278, %p279
      %p281 = scmp.ne.s32.totalorder %s267, %s268
      %p282 = scmp.eq.s32.totalorder %s32, 7
      %p283 = por %p281, %p282
      %p285 = scmp.ne.s32.totalorder %s268, %s284
      %p286 = scmp.eq.s32.totalorder %s32, 0
      %p287 = por %p285, %p286
      %s288 = ssub.s32 %s35, %s44
      %p289 = scmp.eq.s32.totalorder %s288, 0
      %s291 = sadd.s32 %s290, 1
      %s292 = scalar_select %p289, %s290, %s291
      %p295 = pneg %p289
      %p296 = scmp.eq.s32.totalorder %s26, 7
      %p297 = por %p295, %p296
      %p298 = scmp.ne.s32.totalorder %s290, %s293
      %p299 = scmp.eq.s32.totalorder %s26, 0
      %p300 = por %p298, %p299
      %p301 = scmp.ne.s32.totalorder %s290, %s293
      %p302 = scmp.eq.s32.totalorder %s31, 7
      %p303 = por %p301, %p302
      %p304 = scmp.ne.s32.totalorder %s293, %s294
      %p305 = scmp.eq.s32.totalorder %s31, 0
      %p306 = por %p304, %p305
      %p307 = scmp.ne.s32.totalorder %s293, %s294
      %p308 = scmp.eq.s32.totalorder %s32, 7
      %p309 = por %p307, %p308
      %p311 = scmp.ne.s32.totalorder %s294, %s310
      %p312 = scmp.eq.s32.totalorder %s32, 0
      %p313 = por %p311, %p312
      %s314 = ssub.s32 %s35, %s44
      %p315 = scmp.eq.s32.totalorder %s314, 0
      %s317 = sadd.s32 %s316, 1
      %s318 = scalar_select %p315, %s316, %s317
      %p321 = pneg %p315
      %p322 = scmp.eq.s32.totalorder %s26, 7
      %p323 = por %p321, %p322
      %p324 = scmp.ne.s32.totalorder %s316, %s319
      %p325 = scmp.eq.s32.totalorder %s26, 0
      %p326 = por %p324, %p325
      %p327 = scmp.ne.s32.totalorder %s316, %s319
      %p328 = scmp.eq.s32.totalorder %s31, 7
      %p329 = por %p327, %p328
      %p330 = scmp.ne.s32.totalorder %s319, %s320
      %p331 = scmp.eq.s32.totalorder %s31, 0
      %p332 = por %p330, %p331
      %p333 = scmp.ne.s32.totalorder %s319, %s320
      %p334 = scmp.eq.s32.totalorder %s32, 7
      %p335 = por %p333, %p334
      %p337 = scmp.ne.s32.totalorder %s320, %s336
      %p338 = scmp.eq.s32.totalorder %s32, 0
      %p339 = por %p337, %p338
      %s341 = sadd.s32 %s340, 1
      %p344 = scmp.eq.s32.totalorder %s26, 7
      %p345 = scmp.ne.s32.totalorder %s340, %s342
      %p346 = scmp.eq.s32.totalorder %s26, 0
      %p347 = por %p345, %p346
      %p348 = scmp.ne.s32.totalorder %s340, %s342
      %p349 = scmp.eq.s32.totalorder %s31, 7
      %p350 = por %p348, %p349
      %p351 = scmp.ne.s32.totalorder %s342, %s343
      %p352 = scmp.eq.s32.totalorder %s31, 0
      %p353 = por %p351, %p352
      %p354 = scmp.ne.s32.totalorder %s342, %s343
      %p355 = scmp.eq.s32.totalorder %s32, 7
      %p356 = por %p354, %p355
      %p358 = scmp.ne.s32.totalorder %s343, %s357
      %p359 = scmp.eq.s32.totalorder %s32, 0
      %p360 = por %p358, %p359
      %s362 = sadd.s32 %s361, 1
      %p365 = scmp.eq.s32.totalorder %s26, 7
      %p366 = scmp.ne.s32.totalorder %s361, %s363
      %p367 = scmp.eq.s32.totalorder %s26, 0
      %p368 = por %p366, %p367
      %p369 = scmp.ne.s32.totalorder %s361, %s363
      %p370 = scmp.eq.s32.totalorder %s31, 7
      %p371 = por %p369, %p370
      %p372 = scmp.ne.s32.totalorder %s363, %s364
      %p373 = scmp.eq.s32.totalorder %s31, 0
      %p374 = por %p372, %p373
      %p375 = scmp.ne.s32.totalorder %s363, %s364
      %p376 = scmp.eq.s32.totalorder %s32, 7
      %p377 = por %p375, %p376
      %p379 = scmp.ne.s32.totalorder %s364, %s378
      %p380 = scmp.eq.s32.totalorder %s32, 0
      %p381 = por %p379, %p380
      %s382 = ssub.s32 %s33, %s52
      %s383 = ssub.s32 %s34, %s48
      %s384 = sor.u32 %s382, %s383
      %p385 = scmp.eq.s32.totalorder %s384, 0
      %s387 = sadd.s32 %s386, 1
      %s388 = scalar_select %p385, %s386, %s387
      %p391 = pneg %p385
      %p392 = scmp.eq.s32.totalorder %s26, 7
      %p393 = por %p391, %p392
      %p394 = scmp.ne.s32.totalorder %s386, %s389
      %p395 = scmp.eq.s32.totalorder %s26, 0
      %p396 = por %p394, %p395
      %p397 = scmp.ne.s32.totalorder %s386, %s389
      %p398 = scmp.eq.s32.totalorder %s31, 7
      %p399 = por %p397, %p398
      %p400 = scmp.ne.s32.totalorder %s389, %s390
      %p401 = scmp.eq.s32.totalorder %s31, 0
      %p402 = por %p400, %p401
      %p403 = scmp.ne.s32.totalorder %s389, %s390
      %p404 = scmp.eq.s32.totalorder %s32, 7
      %p405 = por %p403, %p404
      %p407 = scmp.ne.s32.totalorder %s390, %s406
      %p408 = scmp.eq.s32.totalorder %s32, 0
      %p409 = por %p407, %p408
      %p410 = scmp.le.s32.totalorder 1, %s26
      %p411 = scmp.lt.s32.totalorder %s26, 9
      %p412 = pnand %p410, %p411
      %p413 = pneg %p412
      // Predicated region
      $region9: #{tpu_custom_call.1} parent=5 // pred_check
        _
      $region10: #{tpu_custom_call.1} parent=5 // pred_check_branch
        %415 = sbr.rel (%p412) target = $region12
      $region11: #{tpu_custom_call.1} parent=5 // pred_region
        %s416 = ssub.s32 %s26, 1
        // Predicated region
        $region13: #{tpu_custom_call.1} parent=11 // pred_check
          %p417 = pneg %p94
        $region14: #{tpu_custom_call.1} parent=11 // pred_check_branch
          %419 = sbr.rel (%p417) target = $region16
        $region15: #{tpu_custom_call.1} parent=11 // pred_region
          %421 = vsyncadd [#allocation7], 0
          %s422 = sshll.u32 %s1, 4
          %s423 = int_to_ptr.hbm [resolvable:$true] %s422
          %s424 = sshll.u32 [#allocation6], 4
          %s425 = int_to_ptr.vmem [resolvable:$true] %s424
          %430 = dma.hbm_to_vmem [thread:$0]  %s423, 2048, %s425, [#allocation7], 128, 128, 8
        $region16: #{tpu_custom_call.1} parent=11 // pred_fallthru
          _
        // Predicated region
        $region17: #{tpu_custom_call.1} parent=11 // pred_check
          %p431 = pneg %p353
        $region18: #{tpu_custom_call.1} parent=11 // pred_check_branch
          %433 = sbr.rel (%p431) target = $region20
        $region19: #{tpu_custom_call.1} parent=11 // pred_region
          _
        $region20: #{tpu_custom_call.1} parent=11 // pred_fallthru
          _
        // Predicated region
        $region21: #{tpu_custom_call.1} parent=11 // pred_check
          %p434 = pneg %p374
        $region22: #{tpu_custom_call.1} parent=11 // pred_check_branch
          %436 = sbr.rel (%p434) target = $region24
        $region23: #{tpu_custom_call.1} parent=11 // pred_region
          _
        $region24: #{tpu_custom_call.1} parent=11 // pred_fallthru
          _
      $region12: #{tpu_custom_call.1} parent=5 // pred_fallthru
        _
      %p437 = scmp.lt.s32.totalorder %s26, 8
      // Predicated region
      $region25: #{tpu_custom_call.1} parent=5 // pred_check
        %p438 = pneg %p437
      $region26: #{tpu_custom_call.1} parent=5 // pred_check_branch
        %440 = sbr.rel (%p438) target = $region28
      $region27: #{tpu_custom_call.1} parent=5 // pred_region
        // Predicated region
        $region29: #{tpu_custom_call.1} parent=27 // pred_check
          %p441 = pneg %p67
        $region30: #{tpu_custom_call.1} parent=27 // pred_check_branch
          %443 = sbr.rel (%p441) target = $region32
        $region31: #{tpu_custom_call.1} parent=27 // pred_region
          %s444 = sand.u32 %s26, 1
          %s445 = scalar_lea.sflag [#allocation4], %s444
          %s446 = sand.u32 %s57, 1
          %s447 = smul.addr %s446, 8
          %s448 = scalar_lea.vmem [#allocation3], %s447
          %450 = vsyncadd %s445, 0
          %s451 = smul.addr %s33, 2
          %s452 = sadd.s32 %s34, %s451
          %s453 = smul.addr %s452, 8
          %s454 = scalar_lea.hbm %s0, %s453
          %s456 = sshll.u32 %s454, 4
          %s457 = int_to_ptr.hbm [resolvable:$true] %s456
          %s458 = sshll.u32 %s448, 4
          %s459 = int_to_ptr.vmem [resolvable:$true] %s458
          %461 = dma.hbm_to_vmem [thread:$0]  %s457, 128, %s459, %s445
        $region32: #{tpu_custom_call.1} parent=27 // pred_fallthru
          _
        // Predicated region
        $region33: #{tpu_custom_call.1} parent=27 // pred_check
          %p462 = pneg %p114
        $region34: #{tpu_custom_call.1} parent=27 // pred_check_branch
          %464 = sbr.rel (%p462) target = $region36
        $region35: #{tpu_custom_call.1} parent=27 // pred_region
          %s465 = sand.u32 %s26, 1
          %s466 = scalar_lea.sflag [#allocation4], %s465
          %s467 = sand.u32 %s104, 1
          %s468 = smul.addr %s467, 8
          %s469 = scalar_lea.vmem [#allocation8], %s468
          %471 = vsyncadd %s466, 0
          %s472 = smul.addr %s34, 8
          %s473 = scalar_lea.hbm %s2, %s472
          %s475 = sshll.u32 %s473, 4
          %s476 = int_to_ptr.hbm [resolvable:$true] %s475
          %s477 = sshll.u32 %s469, 4
          %s478 = int_to_ptr.vmem [resolvable:$true] %s477
          %480 = dma.hbm_to_vmem [thread:$0]  %s476, 128, %s478, %s466
        $region36: #{tpu_custom_call.1} parent=27 // pred_fallthru
          _
        // Predicated region
        $region37: #{tpu_custom_call.1} parent=27 // pred_check
          %p481 = pneg %p142
        $region38: #{tpu_custom_call.1} parent=27 // pred_check_branch
          %483 = sbr.rel (%p481) target = $region40
        $region39: #{tpu_custom_call.1} parent=27 // pred_region
          %s484 = sand.u32 %s26, 1
          %s485 = scalar_lea.sflag [#allocation4], %s484
          %s486 = sand.u32 %s132, 1
          %s487 = smul.addr %s486, 8
          %s488 = scalar_lea.vmem [#allocation9], %s487
          %490 = vsyncadd %s485, 0
          %s491 = smul.addr %s33, 2
          %s492 = sadd.s32 %s34, %s491
          %s493 = smul.addr %s492, 8
          %s494 = scalar_lea.hbm %s3, %s493
          %s496 = sshll.u32 %s494, 4
          %s497 = int_to_ptr.hbm [resolvable:$true] %s496
          %s498 = sshll.u32 %s488, 4
          %s499 = int_to_ptr.vmem [resolvable:$true] %s498
          %501 = dma.hbm_to_vmem [thread:$0]  %s497, 128, %s499, %s485
        $region40: #{tpu_custom_call.1} parent=27 // pred_fallthru
          _
        // Predicated region
        $region41: #{tpu_custom_call.1} parent=27 // pred_check
          %p502 = pneg %p170
        $region42: #{tpu_custom_call.1} parent=27 // pred_check_branch
          %504 = sbr.rel (%p502) target = $region44
        $region43: #{tpu_custom_call.1} parent=27 // pred_region
          %s505 = sand.u32 %s26, 1
          %s506 = scalar_lea.sflag [#allocation4], %s505
          %s507 = sand.u32 %s160, 1
          %s508 = smul.addr %s507, 8
          %s509 = scalar_lea.vmem [#allocation10], %s508
          %511 = vsyncadd %s506, 0
          %s512 = smul.addr %s33, 2
          %s513 = sadd.s32 %s34, %s512
          %s514 = smul.addr %s513, 8
          %s515 = scalar_lea.hbm %s4, %s514
          %s517 = sshll.u32 %s515, 4
          %s518 = int_to_ptr.hbm [resolvable:$true] %s517
          %s519 = sshll.u32 %s509, 4
          %s520 = int_to_ptr.vmem [resolvable:$true] %s519
          %522 = dma.hbm_to_vmem [thread:$0]  %s518, 128, %s520, %s506
        $region44: #{tpu_custom_call.1} parent=27 // pred_fallthru
          _
        // Predicated region
        $region45: #{tpu_custom_call.1} parent=27 // pred_check
          %p523 = pneg %p196
        $region46: #{tpu_custom_call.1} parent=27 // pred_check_branch
          %525 = sbr.rel (%p523) target = $region48
        $region47: #{tpu_custom_call.1} parent=27 // pred_region
          %s526 = sand.u32 %s26, 1
          %s527 = scalar_lea.sflag [#allocation4], %s526
          %s528 = sand.u32 %s186, 1
          %s529 = smul.addr %s528, 256
          %s530 = scalar_lea.vmem [#allocation11], %s529
          %532 = vsyncadd %s527, 0
          %s533 = smul.addr %s35, 32
          %s534 = smul.addr %s533, 8
          %s535 = scalar_lea.hbm %s5, %s534
          %s536 = sshll.u32 %s535, 4
          %s537 = int_to_ptr.hbm [resolvable:$true] %s536
          %s538 = sshll.u32 %s530, 4
          %s539 = int_to_ptr.vmem [resolvable:$true] %s538
          %544 = dma.hbm_to_vmem [thread:$0]  %s537, 4096, %s539, %s527, 256, 256, 16
        $region48: #{tpu_custom_call.1} parent=27 // pred_fallthru
          _
        // Predicated region
        $region49: #{tpu_custom_call.1} parent=27 // pred_check
          %p545 = pneg %p222
        $region50: #{tpu_custom_call.1} parent=27 // pred_check_branch
          %547 = sbr.rel (%p545) target = $region52
        $region51: #{tpu_custom_call.1} parent=27 // pred_region
          %s548 = sand.u32 %s26, 1
          %s549 = scalar_lea.sflag [#allocation4], %s548
          %s550 = sand.u32 %s212, 1
          %s551 = smul.addr %s550, 256
          %s552 = scalar_lea.vmem [#allocation12], %s551
          %554 = vsyncadd %s549, 0
          %s555 = smul.addr %s35, 32
          %s556 = smul.addr %s555, 8
          %s557 = scalar_lea.hbm %s6, %s556
          %s558 = sshll.u32 %s557, 4
          %s559 = int_to_ptr.hbm [resolvable:$true] %s558
          %s560 = sshll.u32 %s552, 4
          %s561 = int_to_ptr.vmem [resolvable:$true] %s560
          %566 = dma.hbm_to_vmem [thread:$0]  %s559, 4096, %s561, %s549, 256, 256, 16
        $region52: #{tpu_custom_call.1} parent=27 // pred_fallthru
          _
        // Predicated region
        $region53: #{tpu_custom_call.1} parent=27 // pred_check
          %p567 = pneg %p248
        $region54: #{tpu_custom_call.1} parent=27 // pred_check_branch
          %569 = sbr.rel (%p567) target = $region56
        $region55: #{tpu_custom_call.1} parent=27 // pred_region
          %p570 = scmp.lt.s32.totalorder %s35, 1
          %s571 = scalar_select %p570, %s35, 1
          %s572 = smul.addr %s571, 2
          %s573 = scalar_lea.vmem %s7, %s572
        $region56: #{tpu_custom_call.1} parent=27 // pred_fallthru
          _
        // Predicated region
        $region57: #{tpu_custom_call.1} parent=27 // pred_check
          %p574 = pneg %p274
        $region58: #{tpu_custom_call.1} parent=27 // pred_check_branch
          %576 = sbr.rel (%p574) target = $region60
        $region59: #{tpu_custom_call.1} parent=27 // pred_region
          %s577 = sand.u32 %s26, 1
          %s578 = scalar_lea.sflag [#allocation4], %s577
          %s579 = sand.u32 %s264, 1
          %s580 = smul.addr %s579, 128
          %s581 = scalar_lea.vmem [#allocation13], %s580
          %583 = vsyncadd %s578, 0
          %s584 = smul.addr %s35, 16
          %s585 = smul.addr %s584, 8
          %s586 = scalar_lea.hbm %s8, %s585
          %s587 = sshll.u32 %s586, 4
          %s588 = int_to_ptr.hbm [resolvable:$true] %s587
          %s589 = sshll.u32 %s581, 4
          %s590 = int_to_ptr.vmem [resolvable:$true] %s589
          %595 = dma.hbm_to_vmem [thread:$0]  %s588, 2048, %s590, %s578, 128, 128, 8
        $region60: #{tpu_custom_call.1} parent=27 // pred_fallthru
          _
        // Predicated region
        $region61: #{tpu_custom_call.1} parent=27 // pred_check
          %p596 = pneg %p300
        $region62: #{tpu_custom_call.1} parent=27 // pred_check_branch
          %598 = sbr.rel (%p596) target = $region64
        $region63: #{tpu_custom_call.1} parent=27 // pred_region
          %s599 = sand.u32 %s26, 1
          %s600 = scalar_lea.sflag [#allocation4], %s599
          %s601 = sand.u32 %s290, 1
          %s602 = smul.addr %s601, 128
          %s603 = scalar_lea.vmem [#allocation14], %s602
          %605 = vsyncadd %s600, 0
          %s606 = smul.addr %s35, 16
          %s607 = smul.addr %s606, 8
          %s608 = scalar_lea.hbm %s9, %s607
          %s609 = sshll.u32 %s608, 4
          %s610 = int_to_ptr.hbm [resolvable:$true] %s609
          %s611 = sshll.u32 %s603, 4
          %s612 = int_to_ptr.vmem [resolvable:$true] %s611
          %617 = dma.hbm_to_vmem [thread:$0]  %s610, 2048, %s612, %s600, 128, 128, 8
        $region64: #{tpu_custom_call.1} parent=27 // pred_fallthru
          _
        // Predicated region
        $region65: #{tpu_custom_call.1} parent=27 // pred_check
          %p618 = pneg %p326
        $region66: #{tpu_custom_call.1} parent=27 // pred_check_branch
          %620 = sbr.rel (%p618) target = $region68
        $region67: #{tpu_custom_call.1} parent=27 // pred_region
          %p621 = scmp.lt.s32.totalorder %s35, 1
          %s622 = scalar_select %p621, %s35, 1
          %s623 = scalar_lea.vmem %s10, %s622
        $region68: #{tpu_custom_call.1} parent=27 // pred_fallthru
          _
      $region28: #{tpu_custom_call.1} parent=5 // pred_fallthru
        _
      %p624 = scmp.le.s32.totalorder 1, %s26
      %p625 = scmp.lt.s32.totalorder %s26, 9
      %p626 = pnand %p624, %p625
      %p627 = pneg %p626
      // Predicated region
      $region69: #{tpu_custom_call.1} parent=5 // pred_check
        _
      $region70: #{tpu_custom_call.1} parent=5 // pred_check_branch
        %629 = sbr.rel (%p626) target = $region72
      $region71: #{tpu_custom_call.1} parent=5 // pred_region
        %s630 = ssub.s32 %s26, 1
        %s631 = sand.u32 %s31, 1
        %s632 = scalar_lea.sflag [#allocation4], %s631
        %s633 = sand.u32 %s60, 1
        %s634 = smul.addr %s633, 8
        %s635 = scalar_lea.vmem [#allocation3], %s634
        // Predicated region
        $region73: #{tpu_custom_call.1} parent=71 // pred_check
          %p636 = pneg %p73
        $region74: #{tpu_custom_call.1} parent=71 // pred_check_branch
          %638 = sbr.rel (%p636) target = $region76
        $region75: #{tpu_custom_call.1} parent=71 // pred_region
          %640 = dma.done %s632, 128
        $region76: #{tpu_custom_call.1} parent=71 // pred_fallthru
          _
        // Predicated region
        $region77: #{tpu_custom_call.1} parent=71 // pred_check
          %p641 = pneg %p94
        $region78: #{tpu_custom_call.1} parent=71 // pred_check_branch
          %643 = sbr.rel (%p641) target = $region80
        $region79: #{tpu_custom_call.1} parent=71 // pred_region
          %645 = dma.done [#allocation7], 2048
        $region80: #{tpu_custom_call.1} parent=71 // pred_fallthru
          _
        %s646 = sand.u32 %s31, 1
        %s647 = scalar_lea.sflag [#allocation4], %s646
        %s648 = sand.u32 %s107, 1
        %s649 = smul.addr %s648, 8
        %s650 = scalar_lea.vmem [#allocation8], %s649
        // Predicated region
        $region81: #{tpu_custom_call.1} parent=71 // pred_check
          %p651 = pneg %p120
        $region82: #{tpu_custom_call.1} parent=71 // pred_check_branch
          %653 = sbr.rel (%p651) target = $region84
        $region83: #{tpu_custom_call.1} parent=71 // pred_region
          %655 = dma.done %s647, 128
        $region84: #{tpu_custom_call.1} parent=71 // pred_fallthru
          _
        %s656 = sand.u32 %s31, 1
        %s657 = scalar_lea.sflag [#allocation4], %s656
        %s658 = sand.u32 %s135, 1
        %s659 = smul.addr %s658, 8
        %s660 = scalar_lea.vmem [#allocation9], %s659
        // Predicated region
        $region85: #{tpu_custom_call.1} parent=71 // pred_check
          %p661 = pneg %p148
        $region86: #{tpu_custom_call.1} parent=71 // pred_check_branch
          %663 = sbr.rel (%p661) target = $region88
        $region87: #{tpu_custom_call.1} parent=71 // pred_region
          %665 = dma.done %s657, 128
        $region88: #{tpu_custom_call.1} parent=71 // pred_fallthru
          _
        %s666 = sand.u32 %s31, 1
        %s667 = scalar_lea.sflag [#allocation4], %s666
        %s668 = sand.u32 %s163, 1
        %s669 = smul.addr %s668, 8
        %s670 = scalar_lea.vmem [#allocation10], %s669
        // Predicated region
        $region89: #{tpu_custom_call.1} parent=71 // pred_check
          %p671 = pneg %p176
        $region90: #{tpu_custom_call.1} parent=71 // pred_check_branch
          %673 = sbr.rel (%p671) target = $region92
        $region91: #{tpu_custom_call.1} parent=71 // pred_region
          %675 = dma.done %s667, 128
        $region92: #{tpu_custom_call.1} parent=71 // pred_fallthru
          _
        %s676 = sand.u32 %s31, 1
        %s677 = scalar_lea.sflag [#allocation4], %s676
        %s678 = sand.u32 %s189, 1
        %s679 = smul.addr %s678, 256
        %s680 = scalar_lea.vmem [#allocation11], %s679
        // Predicated region
        $region93: #{tpu_custom_call.1} parent=71 // pred_check
          %p681 = pneg %p202
        $region94: #{tpu_custom_call.1} parent=71 // pred_check_branch
          %683 = sbr.rel (%p681) target = $region96
        $region95: #{tpu_custom_call.1} parent=71 // pred_region
          %685 = dma.done %s677, 4096
        $region96: #{tpu_custom_call.1} parent=71 // pred_fallthru
          _
        %s686 = sand.u32 %s31, 1
        %s687 = scalar_lea.sflag [#allocation4], %s686
        %s688 = sand.u32 %s215, 1
        %s689 = smul.addr %s688, 256
        %s690 = scalar_lea.vmem [#allocation12], %s689
        // Predicated region
        $region97: #{tpu_custom_call.1} parent=71 // pred_check
          %p691 = pneg %p228
        $region98: #{tpu_custom_call.1} parent=71 // pred_check_branch
          %693 = sbr.rel (%p691) target = $region100
        $region99: #{tpu_custom_call.1} parent=71 // pred_region
          %695 = dma.done %s687, 4096
        $region100: #{tpu_custom_call.1} parent=71 // pred_fallthru
          _
        %s696 = sand.u32 %s31, 1
        %s697 = scalar_lea.sflag [#allocation4], %s696
        %s698 = sand.u32 %s267, 1
        %s699 = smul.addr %s698, 128
        %s700 = scalar_lea.vmem [#allocation13], %s699
        // Predicated region
        $region101: #{tpu_custom_call.1} parent=71 // pred_check
          %p701 = pneg %p280
        $region102: #{tpu_custom_call.1} parent=71 // pred_check_branch
          %703 = sbr.rel (%p701) target = $region104
        $region103: #{tpu_custom_call.1} parent=71 // pred_region
          %705 = dma.done %s697, 2048
        $region104: #{tpu_custom_call.1} parent=71 // pred_fallthru
          _
        %s706 = sand.u32 %s31, 1
        %s707 = scalar_lea.sflag [#allocation4], %s706
        %s708 = sand.u32 %s293, 1
        %s709 = smul.addr %s708, 128
        %s710 = scalar_lea.vmem [#allocation14], %s709
        // Predicated region
        $region105: #{tpu_custom_call.1} parent=71 // pred_check
          %p711 = pneg %p306
        $region106: #{tpu_custom_call.1} parent=71 // pred_check_branch
          %713 = sbr.rel (%p711) target = $region108
        $region107: #{tpu_custom_call.1} parent=71 // pred_region
          %715 = dma.done %s707, 2048
        $region108: #{tpu_custom_call.1} parent=71 // pred_fallthru
          _
        %s716 = sand.u32 %s31, 1
        %s717 = scalar_lea.sflag [#allocation4], %s716
        %s718 = sand.u32 %s60, 1
        %s719 = smul.addr %s718, 8
        %s720 = scalar_lea.vmem [#allocation3], %s719
        %p721 = pneg %p73
        %p722 = pneg %p70
        %p723 = pneg %p94
        %p724 = pneg %p91
        %s725 = sand.u32 %s31, 1
        %s726 = scalar_lea.sflag [#allocation4], %s725
        %s727 = sand.u32 %s107, 1
        %s728 = smul.addr %s727, 8
        %s729 = scalar_lea.vmem [#allocation8], %s728
        %p730 = pneg %p120
        %p731 = pneg %p117
        %s732 = sand.u32 %s31, 1
        %s733 = scalar_lea.sflag [#allocation4], %s732
        %s734 = sand.u32 %s135, 1
        %s735 = smul.addr %s734, 8
        %s736 = scalar_lea.vmem [#allocation9], %s735
        %p737 = pneg %p148
        %p738 = pneg %p145
        %s739 = sand.u32 %s31, 1
        %s740 = scalar_lea.sflag [#allocation4], %s739
        %s741 = sand.u32 %s163, 1
        %s742 = smul.addr %s741, 8
        %s743 = scalar_lea.vmem [#allocation10], %s742
        %p744 = pneg %p176
        %p745 = pneg %p173
        %s746 = sand.u32 %s31, 1
        %s747 = scalar_lea.sflag [#allocation4], %s746
        %s748 = sand.u32 %s189, 1
        %s749 = smul.addr %s748, 256
        %s750 = scalar_lea.vmem [#allocation11], %s749
        %p751 = pneg %p202
        %p752 = pneg %p199
        %s753 = sand.u32 %s31, 1
        %s754 = scalar_lea.sflag [#allocation4], %s753
        %s755 = sand.u32 %s215, 1
        %s756 = smul.addr %s755, 256
        %s757 = scalar_lea.vmem [#allocation12], %s756
        %p758 = pneg %p228
        %p759 = pneg %p225
        %p760 = scmp.lt.s32.totalorder %s38, 1
        %s761 = scalar_select %p760, %s38, 1
        %s762 = smul.addr %s761, 2
        %s763 = scalar_lea.vmem %s7, %s762
        %p764 = pneg %p254
        %p765 = pneg %p251
        %s766 = sand.u32 %s31, 1
        %s767 = scalar_lea.sflag [#allocation4], %s766
        %s768 = sand.u32 %s267, 1
        %s769 = smul.addr %s768, 128
        %s770 = scalar_lea.vmem [#allocation13], %s769
        %p771 = pneg %p280
        %p772 = pneg %p277
        %s773 = sand.u32 %s31, 1
        %s774 = scalar_lea.sflag [#allocation4], %s773
        %s775 = sand.u32 %s293, 1
        %s776 = smul.addr %s775, 128
        %s777 = scalar_lea.vmem [#allocation14], %s776
        %p778 = pneg %p306
        %p779 = pneg %p303
        %p780 = scmp.lt.s32.totalorder %s38, 1
        %s781 = scalar_select %p780, %s38, 1
        %s782 = scalar_lea.vmem %s10, %s781
        %p783 = pneg %p332
        %p784 = pneg %p329
        %p785 = pneg %p353
        %p786 = pneg %p350
        %p787 = pneg %p374
        %p788 = pneg %p371
        %p789 = pneg %p402
        %p790 = pneg %p399
        %s791 = sand.u32 %s389, 1
        %s792 = scalar_lea.sflag [#allocation5], %s791
        %s793 = sand.u32 %s389, 1
        %s794 = smul.addr %s793, 8
        %s795 = scalar_lea.vmem [#allocation15], %s794
        %p796 = scmp.lt.s32.totalorder %s38, 1
        %s797 = scalar_select %p796, %s38, 1
        %s798 = smul.addr %s797, 2
        %s799 = scalar_lea.vmem %s7, %s798
        %p800 = scmp.lt.s32.totalorder %s38, 1
        %s801 = scalar_select %p800, %s38, 1
        %s802 = scalar_lea.vmem %s10, %s801
        %p803 = scmp.eq.s32.totalorder %s38, 0
        // Predicated region
        $region109: #{tpu_custom_call.1} parent=71 // pred_check
          %p804 = pneg %p803
        $region110: #{tpu_custom_call.1} parent=71 // pred_check_branch
          %806 = sbr.rel (%p804) target = $region112
        $region111: #{tpu_custom_call.1} parent=71 // pred_region
          %v807 = vld [vmem:[%s635] sm:$0xff]
          %v808 = vld [vmem:[#allocation6] sm:$0xff]
          %v809 = vld [vmem:[#allocation6 + $0x8] sm:$0xff]
          %v810 = vld [vmem:[#allocation6 + $0x10] sm:$0xff]
          %v811 = vld [vmem:[#allocation6 + $0x18] sm:$0xff]
          %v812 = vld [vmem:[#allocation6 + $0x20] sm:$0xff]
          %v813 = vld [vmem:[#allocation6 + $0x28] sm:$0xff]
          %v814 = vld [vmem:[#allocation6 + $0x30] sm:$0xff]
          %v815 = vld [vmem:[#allocation6 + $0x38] sm:$0xff]
          %v816 = vld [vmem:[#allocation6 + $0x40] sm:$0xff]
          %v817 = vld [vmem:[#allocation6 + $0x48] sm:$0xff]
          %v818 = vld [vmem:[#allocation6 + $0x50] sm:$0xff]
          %v819 = vld [vmem:[#allocation6 + $0x58] sm:$0xff]
          %v820 = vld [vmem:[#allocation6 + $0x60] sm:$0xff]
          %v821 = vld [vmem:[#allocation6 + $0x68] sm:$0xff]
          %v822 = vld [vmem:[#allocation6 + $0x70] sm:$0xff]
          %v823 = vld [vmem:[#allocation6 + $0x78] sm:$0xff]
          %v824 = vld [vmem:[%s650] sm:$0xff]
          %825 = vmatpush.msra.mxu0 %v823
          %826 = vmatpush.msra.mxu0 %v822
          %827 = vmatpush.msra.mxu0 %v821
          %828 = vmatpush.msra.mxu0 %v820
          %829 = vmatpush.msra.mxu0 %v819
          %830 = vmatpush.msra.mxu0 %v818
          %831 = vmatpush.msra.mxu0 %v817
          %832 = vmatpush.msra.mxu0 %v816
          %833 = vmatpush.msra.mxu0 %v815
          %834 = vmatpush.msra.mxu0 %v814
          %835 = vmatpush.msra.mxu0 %v813
          %836 = vmatpush.msra.mxu0 %v812
          %837 = vmatpush.msra.mxu0 %v811
          %838 = vmatpush.msra.mxu0 %v810
          %839 = vmatpush.msra.mxu0 %v809
          %840 = vmatpush.msra.mxu0 %v808
          %841 = vmatmul.f32.gmra.mxu0 %v807
          %v842 = vpop.f32.mrf.mxu0
          %v843 = vadd.f32 %v824, %v842
          %844 = vdwg.mxu0
          %845 = vst [vmem:[#allocation2] sm:$0xff] %v843
        $region112: #{tpu_custom_call.1} parent=71 // pred_fallthru
          _
        %v846 = vld [vmem:[%s660] sm:$0xff]
        %v847 = vld [vmem:[%s670] sm:$0xff]
        %v848 = vld [vmem:[%s680] sm:$0xff]
        %v849 = vld [vmem:[%s680 + $0x8] sm:$0xff]
        %v850 = vld [vmem:[%s680 + $0x10] sm:$0xff]
        %v851 = vld [vmem:[%s680 + $0x18] sm:$0xff]
        %v852 = vld [vmem:[%s680 + $0x20] sm:$0xff]
        %v853 = vld [vmem:[%s680 + $0x28] sm:$0xff]
        %v854 = vld [vmem:[%s680 + $0x30] sm:$0xff]
        %v855 = vld [vmem:[%s680 + $0x38] sm:$0xff]
        %v856 = vld [vmem:[%s680 + $0x40] sm:$0xff]
        %v857 = vld [vmem:[%s680 + $0x48] sm:$0xff]
        %v858 = vld [vmem:[%s680 + $0x50] sm:$0xff]
        %v859 = vld [vmem:[%s680 + $0x58] sm:$0xff]
        %v860 = vld [vmem:[%s680 + $0x60] sm:$0xff]
        %v861 = vld [vmem:[%s680 + $0x68] sm:$0xff]
        %v862 = vld [vmem:[%s680 + $0x70] sm:$0xff]
        %v863 = vld [vmem:[%s680 + $0x78] sm:$0xff]
        %v864 = vld [vmem:[%s680 + $0x80] sm:$0xff]
        %v865 = vld [vmem:[%s680 + $0x88] sm:$0xff]
        %v866 = vld [vmem:[%s680 + $0x90] sm:$0xff]
        %v867 = vld [vmem:[%s680 + $0x98] sm:$0xff]
        %v868 = vld [vmem:[%s680 + $0xa0] sm:$0xff]
        %v869 = vld [vmem:[%s680 + $0xa8] sm:$0xff]
        %v870 = vld [vmem:[%s680 + $0xb0] sm:$0xff]
        %v871 = vld [vmem:[%s680 + $0xb8] sm:$0xff]
        %v872 = vld [vmem:[%s680 + $0xc0] sm:$0xff]
        %v873 = vld [vmem:[%s680 + $0xc8] sm:$0xff]
        %v874 = vld [vmem:[%s680 + $0xd0] sm:$0xff]
        %v875 = vld [vmem:[%s680 + $0xd8] sm:$0xff]
        %v876 = vld [vmem:[%s680 + $0xe0] sm:$0xff]
        %v877 = vld [vmem:[%s680 + $0xe8] sm:$0xff]
        %v878 = vld [vmem:[%s680 + $0xf0] sm:$0xff]
        %v879 = vld [vmem:[%s680 + $0xf8] sm:$0xff]
        %v880 = vld [vmem:[%s690] sm:$0xff]
        %v881 = vld [vmem:[%s690 + $0x8] sm:$0xff]
        %v882 = vld [vmem:[%s690 + $0x10] sm:$0xff]
        %v883 = vld [vmem:[%s690 + $0x18] sm:$0xff]
        %v884 = vld [vmem:[%s690 + $0x20] sm:$0xff]
        %v885 = vld [vmem:[%s690 + $0x28] sm:$0xff]
        %v886 = vld [vmem:[%s690 + $0x30] sm:$0xff]
        %v887 = vld [vmem:[%s690 + $0x38] sm:$0xff]
        %v888 = vld [vmem:[%s690 + $0x40] sm:$0xff]
        %v889 = vld [vmem:[%s690 + $0x48] sm:$0xff]
        %v890 = vld [vmem:[%s690 + $0x50] sm:$0xff]
        %v891 = vld [vmem:[%s690 + $0x58] sm:$0xff]
        %v892 = vld [vmem:[%s690 + $0x60] sm:$0xff]
        %v893 = vld [vmem:[%s690 + $0x68] sm:$0xff]
        %v894 = vld [vmem:[%s690 + $0x70] sm:$0xff]
        %v895 = vld [vmem:[%s690 + $0x78] sm:$0xff]
        %v896 = vld [vmem:[%s690 + $0x80] sm:$0xff]
        %v897 = vld [vmem:[%s690 + $0x88] sm:$0xff]
        %v898 = vld [vmem:[%s690 + $0x90] sm:$0xff]
        %v899 = vld [vmem:[%s690 + $0x98] sm:$0xff]
        %v900 = vld [vmem:[%s690 + $0xa0] sm:$0xff]
        %v901 = vld [vmem:[%s690 + $0xa8] sm:$0xff]
        %v902 = vld [vmem:[%s690 + $0xb0] sm:$0xff]
        %v903 = vld [vmem:[%s690 + $0xb8] sm:$0xff]
        %v904 = vld [vmem:[%s690 + $0xc0] sm:$0xff]
        %v905 = vld [vmem:[%s690 + $0xc8] sm:$0xff]
        %v906 = vld [vmem:[%s690 + $0xd0] sm:$0xff]
        %v907 = vld [vmem:[%s690 + $0xd8] sm:$0xff]
        %v908 = vld [vmem:[%s690 + $0xe0] sm:$0xff]
        %v909 = vld [vmem:[%s690 + $0xe8] sm:$0xff]
        %v910 = vld [vmem:[%s690 + $0xf0] sm:$0xff]
        %v911 = vld [vmem:[%s690 + $0xf8] sm:$0xff]
        %912 = vmatpush.msra.mxu0 %v910
        %913 = vmatpush.msra.mxu0 %v908
        %914 = vmatpush.msra.mxu0 %v906
        %915 = vmatpush.msra.mxu0 %v904
        %916 = vmatpush.msra.mxu0 %v902
        %917 = vmatpush.msra.mxu0 %v900
        %918 = vmatpush.msra.mxu0 %v898
        %919 = vmatpush.msra.mxu0 %v896
        %920 = vmatpush.msra.mxu0 %v894
        %921 = vmatpush.msra.mxu0 %v892
        %922 = vmatpush.msra.mxu0 %v890
        %923 = vmatpush.msra.mxu0 %v888
        %924 = vmatpush.msra.mxu0 %v886
        %925 = vmatpush.msra.mxu0 %v884
        %926 = vmatpush.msra.mxu0 %v882
        %927 = vmatpush.msra.mxu0 %v880
        %928 = vmatmul.f32.gmra.mxu0 %v847
        %v929 = vpop.f32.mrf.mxu0
        %v930 = vadd.f32 0.0, %v929
        %931 = vdwg.mxu0
        %932 = vmatpush.msra.mxu0 %v911
        %933 = vmatpush.msra.mxu0 %v909
        %934 = vmatpush.msra.mxu0 %v907
        %935 = vmatpush.msra.mxu0 %v905
        %936 = vmatpush.msra.mxu0 %v903
        %937 = vmatpush.msra.mxu0 %v901
        %938 = vmatpush.msra.mxu0 %v899
        %939 = vmatpush.msra.mxu0 %v897
        %940 = vmatpush.msra.mxu0 %v895
        %941 = vmatpush.msra.mxu0 %v893
        %942 = vmatpush.msra.mxu0 %v891
        %943 = vmatpush.msra.mxu0 %v889
        %944 = vmatpush.msra.mxu0 %v887
        %945 = vmatpush.msra.mxu0 %v885
        %946 = vmatpush.msra.mxu0 %v883
        %947 = vmatpush.msra.mxu0 %v881
        %948 = vmatmul.f32.gmra.mxu0 %v847
        %v949 = vpop.f32.mrf.mxu0
        %v950 = vadd.f32 0.0, %v949
        %951 = vdwg.mxu0
        %952 = vmatpush.msra.mxu0 %v878
        %953 = vmatpush.msra.mxu0 %v876
        %954 = vmatpush.msra.mxu0 %v874
        %955 = vmatpush.msra.mxu0 %v872
        %956 = vmatpush.msra.mxu0 %v870
        %957 = vmatpush.msra.mxu0 %v868
        %958 = vmatpush.msra.mxu0 %v866
        %959 = vmatpush.msra.mxu0 %v864
        %960 = vmatpush.msra.mxu0 %v862
        %961 = vmatpush.msra.mxu0 %v860
        %962 = vmatpush.msra.mxu0 %v858
        %963 = vmatpush.msra.mxu0 %v856
        %964 = vmatpush.msra.mxu0 %v854
        %965 = vmatpush.msra.mxu0 %v852
        %966 = vmatpush.msra.mxu0 %v850
        %967 = vmatpush.msra.mxu0 %v848
        %968 = vmatmul.f32.gmra.mxu0 %v846
        %v969 = vpop.f32.mrf.mxu0
        %v970 = vadd.f32 %v930, %v969
        %971 = vdwg.mxu0
        %972 = vmatpush.msra.mxu0 %v879
        %973 = vmatpush.msra.mxu0 %v877
        %974 = vmatpush.msra.mxu0 %v875
        %975 = vmatpush.msra.mxu0 %v873
        %976 = vmatpush.msra.mxu0 %v871
        %977 = vmatpush.msra.mxu0 %v869
        %978 = vmatpush.msra.mxu0 %v867
        %979 = vmatpush.msra.mxu0 %v865
        %980 = vmatpush.msra.mxu0 %v863
        %981 = vmatpush.msra.mxu0 %v861
        %982 = vmatpush.msra.mxu0 %v859
        %983 = vmatpush.msra.mxu0 %v857
        %984 = vmatpush.msra.mxu0 %v855
        %985 = vmatpush.msra.mxu0 %v853
        %986 = vmatpush.msra.mxu0 %v851
        %987 = vmatpush.msra.mxu0 %v849
        %988 = vmatmul.f32.gmra.mxu0 %v846
        %v989 = vpop.f32.mrf.mxu0
        %v990 = vadd.f32 %v950, %v989
        %991 = vdwg.mxu0
        %v992 = vld [vmem:[%s799] sm:$0x3]
        %v994 = vperm.slane %v992, 0
        %v995 = vperm.slane %v992, 1
        %v998 = vadd.f32 %v970, %v994
        %v999 = vadd.f32 %v990, %v995
        %v1000 = vxor.u32 %v998, 2147483648
        %v1001 = vmul.f32 %v1000, 1.442695
        %v1002 = vpow.pop %v1001
        %v1003 = vadd.f32 %v1002, 1.0
        %v1004 = vrcp.pop %v1003
        %v1005 = vmul.f32 %v1003, %v1004
        %v1006 = vsub.f32 1.0, %v1005
        %v1007 = vmul.f32 %v1004, %v1006
        %v1008 = vadd.f32 %v1004, %v1007
        %vm1009 = vweird.f32 %v1003
        %vm1010 = vweird.f32 %v1004
        %vm1011 = vmor %vm1009, %vm1010
        %v1012 = vsel %vm1011, %v1004, %v1008
        %v1013 = vand.u32 2147483647, %v1003
        %vm1014 = vcmp.eq.f32.partialorder %v1013, 8.507059e+37
        %v1015 = vand.u32 %v1003, 2147483648
        %v1016 = vor.u32 1.1754944e-38, %v1015
        %v1017 = vsel %vm1014, %v1016, %v1012
        %v1018 = vmul.f32 1.0, %v1017
        %v1019 = vmul.f32 %v1018, %v846
        %v1020 = vld [vmem:[%s700] sm:$0xff]
        %v1021 = vld [vmem:[%s700 + $0x8] sm:$0xff]
        %v1022 = vld [vmem:[%s700 + $0x10] sm:$0xff]
        %v1023 = vld [vmem:[%s700 + $0x18] sm:$0xff]
        %v1024 = vld [vmem:[%s700 + $0x20] sm:$0xff]
        %v1025 = vld [vmem:[%s700 + $0x28] sm:$0xff]
        %v1026 = vld [vmem:[%s700 + $0x30] sm:$0xff]
        %v1027 = vld [vmem:[%s700 + $0x38] sm:$0xff]
        %v1028 = vld [vmem:[%s700 + $0x40] sm:$0xff]
        %v1029 = vld [vmem:[%s700 + $0x48] sm:$0xff]
        %v1030 = vld [vmem:[%s700 + $0x50] sm:$0xff]
        %v1031 = vld [vmem:[%s700 + $0x58] sm:$0xff]
        %v1032 = vld [vmem:[%s700 + $0x60] sm:$0xff]
        %v1033 = vld [vmem:[%s700 + $0x68] sm:$0xff]
        %v1034 = vld [vmem:[%s700 + $0x70] sm:$0xff]
        %v1035 = vld [vmem:[%s700 + $0x78] sm:$0xff]
        %v1036 = vxor.u32 %v999, 2147483648
        %v1037 = vmul.f32 %v1036, 1.442695
        %v1038 = vpow.pop %v1037
        %v1039 = vadd.f32 %v1038, 1.0
        %v1040 = vrcp.pop %v1039
        %v1041 = vmul.f32 %v1039, %v1040
        %v1042 = vsub.f32 1.0, %v1041
        %v1043 = vmul.f32 %v1040, %v1042
        %v1044 = vadd.f32 %v1040, %v1043
        %vm1045 = vweird.f32 %v1039
        %vm1046 = vweird.f32 %v1040
        %vm1047 = vmor %vm1045, %vm1046
        %v1048 = vsel %vm1047, %v1040, %v1044
        %v1049 = vand.u32 2147483647, %v1039
        %vm1050 = vcmp.eq.f32.partialorder %v1049, 8.507059e+37
        %v1051 = vand.u32 %v1039, 2147483648
        %v1052 = vor.u32 1.1754944e-38, %v1051
        %v1053 = vsel %vm1050, %v1052, %v1048
        %v1054 = vmul.f32 1.0, %v1053
        %v1055 = vmul.f32 %v1054, %v847
        %v1056 = vld [vmem:[%s710] sm:$0xff]
        %v1057 = vld [vmem:[%s710 + $0x8] sm:$0xff]
        %v1058 = vld [vmem:[%s710 + $0x10] sm:$0xff]
        %v1059 = vld [vmem:[%s710 + $0x18] sm:$0xff]
        %v1060 = vld [vmem:[%s710 + $0x20] sm:$0xff]
        %v1061 = vld [vmem:[%s710 + $0x28] sm:$0xff]
        %v1062 = vld [vmem:[%s710 + $0x30] sm:$0xff]
        %v1063 = vld [vmem:[%s710 + $0x38] sm:$0xff]
        %v1064 = vld [vmem:[%s710 + $0x40] sm:$0xff]
        %v1065 = vld [vmem:[%s710 + $0x48] sm:$0xff]
        %v1066 = vld [vmem:[%s710 + $0x50] sm:$0xff]
        %v1067 = vld [vmem:[%s710 + $0x58] sm:$0xff]
        %v1068 = vld [vmem:[%s710 + $0x60] sm:$0xff]
        %v1069 = vld [vmem:[%s710 + $0x68] sm:$0xff]
        %v1070 = vld [vmem:[%s710 + $0x70] sm:$0xff]
        %v1071 = vld [vmem:[%s710 + $0x78] sm:$0xff]
        %1072 = vmatpush.msra.mxu0 %v1071
        %1073 = vmatpush.msra.mxu0 %v1070
        %1074 = vmatpush.msra.mxu0 %v1069
        %1075 = vmatpush.msra.mxu0 %v1068
        %1076 = vmatpush.msra.mxu0 %v1067
        %1077 = vmatpush.msra.mxu0 %v1066
        %1078 = vmatpush.msra.mxu0 %v1065
        %1079 = vmatpush.msra.mxu0 %v1064
        %1080 = vmatpush.msra.mxu0 %v1063
        %1081 = vmatpush.msra.mxu0 %v1062
        %1082 = vmatpush.msra.mxu0 %v1061
        %1083 = vmatpush.msra.mxu0 %v1060
        %1084 = vmatpush.msra.mxu0 %v1059
        %1085 = vmatpush.msra.mxu0 %v1058
        %1086 = vmatpush.msra.mxu0 %v1057
        %1087 = vmatpush.msra.mxu0 %v1056
        %1088 = vmatmul.f32.gmra.mxu0 %v1055
        %v1089 = vpop.f32.mrf.mxu0
        %v1090 = vadd.f32 0.0, %v1089
        %1091 = vdwg.mxu0
        %1092 = vmatpush.msra.mxu0 %v1035
        %1093 = vmatpush.msra.mxu0 %v1034
        %1094 = vmatpush.msra.mxu0 %v1033
        %1095 = vmatpush.msra.mxu0 %v1032
        %1096 = vmatpush.msra.mxu0 %v1031
        %1097 = vmatpush.msra.mxu0 %v1030
        %1098 = vmatpush.msra.mxu0 %v1029
        %1099 = vmatpush.msra.mxu0 %v1028
        %1100 = vmatpush.msra.mxu0 %v1027
        %1101 = vmatpush.msra.mxu0 %v1026
        %1102 = vmatpush.msra.mxu0 %v1025
        %1103 = vmatpush.msra.mxu0 %v1024
        %1104 = vmatpush.msra.mxu0 %v1023
        %1105 = vmatpush.msra.mxu0 %v1022
        %1106 = vmatpush.msra.mxu0 %v1021
        %1107 = vmatpush.msra.mxu0 %v1020
        %1108 = vmatmul.f32.gmra.mxu0 %v1019
        %v1109 = vpop.f32.mrf.mxu0
        %v1110 = vadd.f32 %v1090, %v1109
        %1111 = vdwg.mxu0
        %v1112 = vld [vmem:[#allocation2] sm:$0xff]
        %v1113 = vadd.f32 %v1112, %v1110
        %v1114 = vld [vmem:[%s802] sm:$0x1]
        %v1116 = vperm.slane %v1114, 0
        %v1118 = vadd.f32 %v1113, %v1116
        %1119 = vst [vmem:[#allocation2] sm:$0xff] %v1118
        %p1120 = scmp.eq.s32.totalorder %s38, 1
        // Predicated region
        $region113: #{tpu_custom_call.1} parent=71 // pred_check
          %p1121 = pneg %p1120
        $region114: #{tpu_custom_call.1} parent=71 // pred_check_branch
          %1123 = sbr.rel (%p1121) target = $region116
        $region115: #{tpu_custom_call.1} parent=71 // pred_region
          %v1124 = vld [vmem:[#allocation2] sm:$0xff]
          %1125 = vadd.xlane.f32.xlu0 %v1124
          %v1126 = vpop.xlane.xlu0 %1125
          %v1127 = vrcp.pop 128.0
          %v1128 = vmul.f32 128.0, %v1127
          %v1129 = vsub.f32 1.0, %v1128
          %v1130 = vmul.f32 %v1127, %v1129
          %v1131 = vadd.f32 %v1127, %v1130
          %vm1132 = vweird.f32 %v1127
          %v1133 = vsel %vm1132, %v1127, %v1131
          %v1134 = vmul.f32 %v1126, %v1133
          %v1135 = vsub.f32 %v1124, %v1134
          %v1136 = vmul.f32 %v1135, %v1135
          %1137 = vadd.xlane.f32.xlu0 %v1136
          %v1138 = vpop.xlane.xlu0 %1137
          %v1139 = vmul.f32 %v1138, %v1133
          %v1140 = vadd.f32 %v1139, 1e-06
          %v1141 = vrsqrt.pop %v1140
          %v1142 = vmul.f32 %v1141, %v1140
          %v1143 = vmul.f32 %v1142, %v1141
          %v1144 = vmul.f32 0.5, %v1143
          %v1145 = vsub.f32 1.5, %v1144
          %v1146 = vmul.f32 %v1141, %v1145
          %vm1147 = vweird.f32 %v1140
          %vm1148 = vweird.f32 %v1141
          %vm1149 = vmor %vm1147, %vm1148
          %v1150 = vsel %vm1149, %v1141, %v1146
          %v1151 = vmul.f32 %v1135, %v1150
          %v1152 = vld [vmem:[%s11] sm:$0x1]
          %v1154 = vperm.slane %v1152, 0
          %v1156 = vmul.f32 %v1151, %v1154
          %v1157 = vld [vmem:[%s12] sm:$0x1]
          %v1159 = vperm.slane %v1157, 0
          %v1161 = vadd.f32 %v1156, %v1159
          %1162 = vst [vmem:[%s795] sm:$0xff] %v1161
        $region116: #{tpu_custom_call.1} parent=71 // pred_fallthru
          _
        %s1163 = sand.u32 %s389, 1
        %s1164 = scalar_lea.sflag [#allocation5], %s1163
        %s1165 = sand.u32 %s389, 1
        %s1166 = smul.addr %s1165, 8
        %s1167 = scalar_lea.vmem [#allocation15], %s1166
        // Predicated region
        $region117: #{tpu_custom_call.1} parent=71 // pred_check
          %p1168 = pneg %p399
        $region118: #{tpu_custom_call.1} parent=71 // pred_check_branch
          %1170 = sbr.rel (%p1168) target = $region120
        $region119: #{tpu_custom_call.1} parent=71 // pred_region
          %1172 = vsyncadd %s1164, 0
          %s1173 = smul.addr %s36, 2
          %s1174 = sadd.s32 %s37, %s1173
          %s1175 = smul.addr %s1174, 8
          %s1176 = scalar_lea.hbm %s13, %s1175
          %s1178 = sshll.u32 %s1167, 4
          %s1179 = int_to_ptr.vmem [resolvable:$true] %s1178
          %s1180 = sshll.u32 %s1176, 4
          %s1181 = int_to_ptr.hbm [resolvable:$true] %s1180
          %1183 = dma.vmem_to_hbm [thread:$0]  %s1179, 128, %s1181, %s1164
        $region120: #{tpu_custom_call.1} parent=71 // pred_fallthru
          _
      $region72: #{tpu_custom_call.1} parent=5 // pred_fallthru
        _
      %p1184 = scmp.le.s32.totalorder 2, %s26
      // Predicated region
      $region121: #{tpu_custom_call.1} parent=5 // pred_check
        %p1185 = pneg %p1184
      $region122: #{tpu_custom_call.1} parent=5 // pred_check_branch
        %1187 = sbr.rel (%p1185) target = $region124
      $region123: #{tpu_custom_call.1} parent=5 // pred_region
        %s1188 = ssub.s32 %s26, 2
        // Predicated region
        $region125: #{tpu_custom_call.1} parent=123 // pred_check
          %p1189 = pneg %p405
        $region126: #{tpu_custom_call.1} parent=123 // pred_check_branch
          %1191 = sbr.rel (%p1189) target = $region128
        $region127: #{tpu_custom_call.1} parent=123 // pred_region
          %s1192 = sand.u32 %s390, 1
          %s1193 = scalar_lea.sflag [#allocation5], %s1192
          %s1194 = sand.u32 %s390, 1
          %s1195 = smul.addr %s1194, 8
          %s1196 = scalar_lea.vmem [#allocation15], %s1195
          %1198 = dma.done %s1193, 128
        $region128: #{tpu_custom_call.1} parent=123 // pred_fallthru
          _
      $region124: #{tpu_custom_call.1} parent=5 // pred_fallthru
        _
    $region6: #{tpu_custom_call.1} parent=1 // loop_footer
      %s30 = sadd.s32 1, %s26
    $region7: #{tpu_custom_call.1} parent=1 // loop_footer_branch
      %25 = sbr.rel target = $region3
    $region8: #{tpu_custom_call.1} parent=1 // loop_exit
      _
    %1199 = vsyncpa [#allocation4], 1
    %s1200 = scalar_lea.sflag [#allocation4], 1
    %1201 = vsyncpa %s1200, 1
    %1202 = vsyncpa [#allocation7], 1
    %1203 = vsyncpa [#allocation5], 1
    %s1204 = scalar_lea.sflag [#allocation5], 1
    %1205 = vsyncpa %s1204, 1

</llo_original>
